<compile_context>
chip_gen: v7x
topology: tpu7x:2x2x1
jax: 0.10.0
libtpu: 0.0.40
codegen_flags: <defaults>
</compile_context>

<pallas_src>
import functools

import jax
import jax.numpy as jnp
from jax.experimental import pallas as pl
from jax.experimental.pallas import tpu as pltpu


def _round_up(x, m):
    return (x + m - 1) // m * m


# --------------------------- fused LSTM + FC kernel --------------------------- #
def _make_lstm_kernel(T, Bp, in_sizes, H, O, compute_dtype):
    """Fused multi-layer LSTM + Linear head for a fixed (T, Bp, widths, H, O) config."""
    L = len(in_sizes)
    has_seq = L > 1
    unroll = T if T <= 16 else 8

    def kernel(*refs):
        # ---- unpack refs: inputs, then output, then scratch ----
        idx = 0
        x_ref = refs[idx]; idx += 1                  # (T, Bp, I)  time-major input, f32
        w_ih_refs = refs[idx:idx + L]; idx += L      # (in_l, 4H)  bf16
        w_hh_refs = refs[idx:idx + L]; idx += L      # (H, 4H)     bf16
        b_refs = refs[idx:idx + L]; idx += L         # (1, 4H)     f32  (b_ih + b_hh)
        fc_w_ref = refs[idx]; idx += 1               # (H, O)      bf16
        fc_b_ref = refs[idx]; idx += 1               # (1, O)      f32
        out_ref = refs[idx]; idx += 1                # (L*Bp, O)   f32
        gates_ref = refs[idx]; idx += 1              # (T, Bp, 4H) f32 scratch
        seq_ref = refs[idx] if has_seq else None     # (T, Bp, H)  f32 scratch

        h_finals = []

        for l in range(L):                           # layers unrolled (L is small)
            in_sz = in_sizes[l]

            # Input projection for the WHOLE sequence in one matmul (+ bias once),
            # off the recurrent critical path. Bp % 8 == 0 makes the reshape free.
            if l == 0:
                seq_in = x_ref[...].reshape(T * Bp, in_sz)
            else:
                seq_in = seq_ref[...].reshape(T * Bp, in_sz)
            proj = jnp.dot(seq_in.astype(compute_dtype), w_ih_refs[l][...],
                           preferred_element_type=jnp.float32)
            gates_ref[...] = (proj + b_refs[l][...]).reshape(T, Bp, 4 * H)

            last_layer = (l == L - 1)

            def step(t, carry, _l=l, _last=last_layer):
                h, c = carry                                        # f32 state
                g = gates_ref[t] + jnp.dot(
                    h.astype(compute_dtype), w_hh_refs[_l][...],
                    preferred_element_type=jnp.float32)             # (Bp, 4H) f32

                if H % 128 == 0:
                    # Gate boundaries are lane-aligned: only the needed EUP work.
                    i_g = jax.nn.sigmoid(g[:, 0 * H:1 * H])
                    f_g = jax.nn.sigmoid(g[:, 1 * H:2 * H])
                    g_g = jnp.tanh(g[:, 2 * H:3 * H])
                    o_g = jax.nn.sigmoid(g[:, 3 * H:4 * H])
                else:
                    # Small H: 4H fits one vreg; full-width activations, then slice.
                    sig = jax.nn.sigmoid(g)
                    th = jnp.tanh(g)
                    i_g = sig[:, 0 * H:1 * H]
                    f_g = sig[:, 1 * H:2 * H]
                    g_g = th[:, 2 * H:3 * H]
                    o_g = sig[:, 3 * H:4 * H]

                c_new = f_g * c + i_g * g_g
                h_new = o_g * jnp.tanh(c_new)
                if not _last:                       # feed the next layer's projection
                    seq_ref[t] = h_new
                return h_new, c_new

            h0 = jnp.zeros((Bp, H), jnp.float32)    # h_0 = c_0 = 0 as in the module
            c0 = jnp.zeros((Bp, H), jnp.float32)
            h_fin, _ = jax.lax.fori_loop(0, T, step, (h0, c0), unroll=unroll)
            h_finals.append(h_fin)

        # Fused FC head: single (L*Bp, H) x (H, O) matmul, one store.
        h_stack = jnp.concatenate(h_finals, axis=0)                 # (L*Bp, H)
        out_ref[...] = (
            jnp.dot(h_stack.astype(compute_dtype), fc_w_ref[...],
                    preferred_element_type=jnp.float32)
            + fc_b_ref[...]
        ).astype(out_ref.dtype)

    return kernel


# ------------------------------- full forward --------------------------------- #
def lstm_predictor_forward(x, params):
    """x: (B, T, I) batch-first f32. Returns (num_layers*B, output_size), matching
    `_, (h_n, _) = lstm(x); fc(h_n.view(-1, H))` of the PyTorch module."""
    B, T, I = x.shape
    lstm = params["lstm"]
    L = len(lstm)
    H = lstm[0]["w_hh"].shape[0]
    O = params["fc_w"].shape[1]
    in_sizes = tuple([I] + [H] * (L - 1))

    # Pad batch to a full 8-sublane tile; pass x time-major (layout plumbing in HBM).
    Bp = _round_up(max(B, 1), 8)
    x_tm = jnp.swapaxes(x, 0, 1)                     # (T, B, I)
    if Bp != B:
        x_tm = jnp.pad(x_tm, ((0, 0), (0, Bp - B), (0, 0)))

    kernel = _make_lstm_kernel(T, Bp, in_sizes, H, O, compute_dtype=jnp.bfloat16)

    inputs = [x_tm]
    inputs += [p["w_ih"] for p in lstm]              # (in_l, 4H) bf16
    inputs += [p["w_hh"] for p in lstm]              # (H, 4H)    bf16
    inputs += [p["b"] for p in lstm]                 # (1, 4H)    f32
    inputs += [params["fc_w"], params["fc_b"]]       # (H, O) bf16, (1, O) f32

    scratch_shapes = [pltpu.VMEM((T, Bp, 4 * H), jnp.float32)]
    if L > 1:
        scratch_shapes.append(pltpu.VMEM((T, Bp, H), jnp.float32))

    # Scoped-VMEM limit from actual residency, with headroom, capped for v7x (64 MiB).
    def _nbytes(a):
        return int(a.size) * jnp.dtype(a.dtype).itemsize
    est = sum(_nbytes(a) for a in inputs)
    est += 4 * (L * Bp * O)                               # output
    est += 4 * T * Bp * 4 * H                             # gates scratch
    est += (4 * T * Bp * H) if L > 1 else 0               # inter-layer sequence scratch
    vmem_limit = int(min(max(4 * est, 32 * 1024 * 1024), 64 * 1024 * 1024))

    out = pl.pallas_call(
        kernel,
        out_shape=jax.ShapeDtypeStruct((L * Bp, O), jnp.float32),
        scratch_shapes=scratch_shapes,
        compiler_params=pltpu.CompilerParams(vmem_limit_bytes=vmem_limit),
    )(*inputs)

    # h_n.view(-1, H) layer-major stacking -> drop batch padding -> (L*B, O)
    return out.reshape(L, Bp, O)[:, :B, :].reshape(L * B, O)


# -------------------------------- param init ---------------------------------- #
def init_params(key, input_size, hidden_size, num_layers, output_size=1):
    """Deterministic init mimicking PyTorch's U(-1/sqrt(H), 1/sqrt(H)).
    Weights are stored transposed and in bf16 for native-MXU matmuls; biases are
    pre-summed (b_ih + b_hh) and kept in f32."""
    H = hidden_size
    bound = 1.0 / jnp.sqrt(jnp.float32(H))
    lstm_params = []
    for layer in range(num_layers):
        in_sz = input_size if layer == 0 else H
        key, k1, k2, k3, k4 = jax.random.split(key, 5)
        w_ih = jax.random.uniform(k1, (4 * H, in_sz), jnp.float32, -bound, bound)
        w_hh = jax.random.uniform(k2, (4 * H, H), jnp.float32, -bound, bound)
        b_ih = jax.random.uniform(k3, (4 * H,), jnp.float32, -bound, bound)
        b_hh = jax.random.uniform(k4, (4 * H,), jnp.float32, -bound, bound)
        lstm_params.append({
            "w_ih": w_ih.T.astype(jnp.bfloat16),            # (in_sz, 4H)
            "w_hh": w_hh.T.astype(jnp.bfloat16),            # (H, 4H)
            "b": (b_ih + b_hh).reshape(1, 4 * H),            # (1, 4H) f32
        })
    key, k5, k6 = jax.random.split(key, 3)
    fc_w = jax.random.uniform(k5, (output_size, H), jnp.float32, -bound, bound)
    fc_b = jax.random.uniform(k6, (output_size,), jnp.float32, -bound, bound)
    return {
        "lstm": lstm_params,
        "fc_w": fc_w.T.astype(jnp.bfloat16),                 # (H, output_size)
        "fc_b": fc_b.reshape(1, output_size),                 # (1, output_size) f32
    }


# ---------------------------- pure-JAX reference ------------------------------ #
def _reference_forward(x, params):
    """Same arithmetic (bf16 matmul operands, f32 accumulation/state) in plain JAX."""
    B, T, _ = x.shape
    H = params["lstm"][0]["w_hh"].shape[0]
    seq = x
    finals = []
    for p in params["lstm"]:
        w_ih, w_hh, b = p["w_ih"], p["w_hh"], p["b"]
        h = jnp.zeros((B, H), jnp.float32)
        c = jnp.zeros((B, H), jnp.float32)
        outs = []
        for t in range(T):
            g = (jnp.dot(seq[:, t, :].astype(w_ih.dtype), w_ih,
                         preferred_element_type=jnp.float32)
                 + jnp.dot(h.astype(w_hh.dtype), w_hh,
                           preferred_element_type=jnp.float32)
                 + b)
            i = jax.nn.sigmoid(g[:, 0:H])
            f = jax.nn.sigmoid(g[:, H:2 * H])
            gg = jnp.tanh(g[:, 2 * H:3 * H])
            o = jax.nn.sigmoid(g[:, 3 * H:4 * H])
            c = f * c + i * gg
            h = o * jnp.tanh(c)
            outs.append(h)
        seq = jnp.stack(outs, axis=1)
        finals.append(h)
    h_out = jnp.concatenate(finals, axis=0)                   # (L*B, H) layer-major
    return (jnp.dot(h_out.astype(params["fc_w"].dtype), params["fc_w"],
                    preferred_element_type=jnp.float32)
            + params["fc_b"])


# ----------------------------------- main -------------------------------------- #
if __name__ == "__main__":
    # Small shapes consistent with the module: (batch, seq_len, input_size)
    batch, seq_len, input_size = 2, 8, 4
    hidden_size, num_layers = 32, 2

    key = jax.random.PRNGKey(0)
    key, xk = jax.random.split(key)
    x = jax.random.normal(xk, (batch, seq_len, input_size), jnp.float32)

    params = init_params(key, input_size, hidden_size, num_layers)

    fwd = jax.jit(functools.partial(lstm_predictor_forward, params=params))
    out = fwd(x)
    jax.block_until_ready(out)
    assert out.shape == (num_layers * batch, 1), out.shape

    ref = _reference_forward(x, params)
    max_err = float(jnp.max(jnp.abs(out - ref)))
    assert jnp.allclose(out, ref, atol=1e-3, rtol=1e-3), max_err

    print("KERNEL_OK")
</pallas_src>

<mosaic_0001>
module attributes {stable_mosaic.version = 11 : i64} {
  func.func @kernel(%arg0: memref<8x8x4xf32, #tpu.memory_space<vmem>>, %arg1: memref<4x128xbf16, #tpu.memory_space<vmem>>, %arg2: memref<32x128xbf16, #tpu.memory_space<vmem>>, %arg3: memref<32x128xbf16, #tpu.memory_space<vmem>>, %arg4: memref<32x128xbf16, #tpu.memory_space<vmem>>, %arg5: memref<1x128xf32, #tpu.memory_space<vmem>>, %arg6: memref<1x128xf32, #tpu.memory_space<vmem>>, %arg7: memref<32x1xbf16, #tpu.memory_space<vmem>>, %arg8: memref<1x1xf32, #tpu.memory_space<vmem>>, %arg9: memref<16x1xf32, #tpu.memory_space<vmem>>, %arg10: memref<8x8x128xf32, #tpu.memory_space<vmem>>, %arg11: memref<8x8x32xf32, #tpu.memory_space<vmem>>) attributes {dimension_semantics = [], scalar_prefetch = 0 : i64, scratch_operands = 2 : i64, tpu.core_type = #tpu.core_type<tc>} {
    %c0 = arith.constant 0 : index
    %c0_0 = arith.constant 0 : index
    %c0_1 = arith.constant 0 : index
    %0 = vector.load %arg0[%c0, %c0_0, %c0_1] : memref<8x8x4xf32, #tpu.memory_space<vmem>>, vector<8x8x4xf32>
    %1 = vector.shape_cast %0 : vector<8x8x4xf32> to vector<64x4xf32>
    %2 = arith.truncf %1 : vector<64x4xf32> to vector<64x4xbf16>
    %c0_2 = arith.constant 0 : index
    %c0_3 = arith.constant 0 : index
    %3 = vector.load %arg1[%c0_2, %c0_3] : memref<4x128xbf16, #tpu.memory_space<vmem>>, vector<4x128xbf16>
    %cst = arith.constant dense<0.000000e+00> : vector<64x128xf32>
    %4 = tpu.matmul %2, %3, %cst {dimension_numbers = #tpu.dot_dimension_numbers<[1], [0], [0], [1], [0, 0, 1, 1], [], []>} : vector<64x4xbf16>, vector<4x128xbf16>, vector<64x128xf32> -> vector<64x128xf32>
    %c0_4 = arith.constant 0 : index
    %c0_5 = arith.constant 0 : index
    %5 = vector.load %arg5[%c0_4, %c0_5] : memref<1x128xf32, #tpu.memory_space<vmem>>, vector<1x128xf32>
    %6 = vector.broadcast %5 : vector<1x128xf32> to vector<64x128xf32>
    %7 = arith.addf %4, %6 : vector<64x128xf32>
    %8 = vector.shape_cast %7 : vector<64x128xf32> to vector<8x8x128xf32>
    %c0_6 = arith.constant 0 : index
    %c0_7 = arith.constant 0 : index
    %c0_8 = arith.constant 0 : index
    %9 = vector.load %arg10[%c0_6, %c0_7, %c0_8] : memref<8x8x128xf32, #tpu.memory_space<vmem>>, vector<8x8x128xf32>
    tpu.vector_store %arg10[%c0_6, %c0_7, %c0_8], %8 {strides = array<i32>} : memref<8x8x128xf32, #tpu.memory_space<vmem>>, vector<8x8x128xf32>,
    %cst_9 = arith.constant 0.000000e+00 : f32
    %10 = vector.broadcast %cst_9 : f32 to vector<8x32xf32>
    %cst_10 = arith.constant 0.000000e+00 : f32
    %11 = vector.broadcast %cst_10 : f32 to vector<8x32xf32>
    %c0_i32 = arith.constant 0 : i32
    %12 = arith.index_cast %c0_i32 : i32 to index
    %c0_11 = arith.constant 0 : index
    %c0_12 = arith.constant 0 : index
    %13 = vector.load %arg10[%12, %c0_11, %c0_12] : memref<8x8x128xf32, #tpu.memory_space<vmem>>, vector<1x8x128xf32>
    %14 = vector.shape_cast %13 : vector<1x8x128xf32> to vector<8x128xf32>
    %15 = arith.truncf %10 : vector<8x32xf32> to vector<8x32xbf16>
    %c0_13 = arith.constant 0 : index
    %c0_14 = arith.constant 0 : index
    %16 = vector.load %arg3[%c0_13, %c0_14] : memref<32x128xbf16, #tpu.memory_space<vmem>>, vector<32x128xbf16>
    %cst_15 = arith.constant dense<0.000000e+00> : vector<8x128xf32>
    %17 = tpu.matmul %15, %16, %cst_15 {dimension_numbers = #tpu.dot_dimension_numbers<[1], [0], [0], [1], [0, 0, 1, 1], [], []>} : vector<8x32xbf16>, vector<32x128xbf16>, vector<8x128xf32> -> vector<8x128xf32>
    %18 = arith.addf %14, %17 : vector<8x128xf32>
    %19 = arith.negf %18 : vector<8x128xf32>
    %20 = math.exp %19 : vector<8x128xf32>
    %cst_16 = arith.constant 1.000000e+00 : f32
    %21 = vector.broadcast %cst_16 : f32 to vector<8x128xf32>
    %22 = arith.addf %21, %20 : vector<8x128xf32>
    %23 = arith.divf %21, %22 : vector<8x128xf32>
    %24 = math.tanh %18 : vector<8x128xf32>
    %25 = vector.extract_strided_slice %23 {offsets = [0, 0], sizes = [8, 32], strides = [1, 1]} : vector<8x128xf32> to vector<8x32xf32>
    %26 = vector.extract_strided_slice %23 {offsets = [0, 32], sizes = [8, 32], strides = [1, 1]} : vector<8x128xf32> to vector<8x32xf32>
    %27 = vector.extract_strided_slice %24 {offsets = [0, 64], sizes = [8, 32], strides = [1, 1]} : vector<8x128xf32> to vector<8x32xf32>
    %28 = vector.extract_strided_slice %23 {offsets = [0, 96], sizes = [8, 32], strides = [1, 1]} : vector<8x128xf32> to vector<8x32xf32>
    %29 = arith.mulf %26, %11 : vector<8x32xf32>
    %30 = arith.mulf %25, %27 : vector<8x32xf32>
    %31 = arith.addf %29, %30 : vector<8x32xf32>
    %32 = math.tanh %31 : vector<8x32xf32>
    %33 = arith.mulf %28, %32 : vector<8x32xf32>
    %34 = arith.index_cast %c0_i32 : i32 to index
    %c0_17 = arith.constant 0 : index
    %c0_18 = arith.constant 0 : index
    %35 = vector.load %arg11[%34, %c0_17, %c0_18] : memref<8x8x32xf32, #tpu.memory_space<vmem>>, vector<1x8x32xf32>
    %36 = vector.shape_cast %35 : vector<1x8x32xf32> to vector<8x32xf32>
    %37 = vector.shape_cast %33 : vector<8x32xf32> to vector<1x8x32xf32>
    tpu.vector_store %arg11[%34, %c0_17, %c0_18], %37 {strides = array<i32>} : memref<8x8x32xf32, #tpu.memory_space<vmem>>, vector<1x8x32xf32>,
    %c1_i32 = arith.constant 1 : i32
    %38 = arith.index_cast %c1_i32 : i32 to index
    %c0_19 = arith.constant 0 : index
    %c0_20 = arith.constant 0 : index
    %39 = vector.load %arg10[%38, %c0_19, %c0_20] : memref<8x8x128xf32, #tpu.memory_space<vmem>>, vector<1x8x128xf32>
    %40 = vector.shape_cast %39 : vector<1x8x128xf32> to vector<8x128xf32>
    %41 = arith.truncf %33 : vector<8x32xf32> to vector<8x32xbf16>
    %c0_21 = arith.constant 0 : index
    %c0_22 = arith.constant 0 : index
    %42 = vector.load %arg3[%c0_21, %c0_22] : memref<32x128xbf16, #tpu.memory_space<vmem>>, vector<32x128xbf16>
    %cst_23 = arith.constant dense<0.000000e+00> : vector<8x128xf32>
    %43 = tpu.matmul %41, %42, %cst_23 {dimension_numbers = #tpu.dot_dimension_numbers<[1], [0], [0], [1], [0, 0, 1, 1], [], []>} : vector<8x32xbf16>, vector<32x128xbf16>, vector<8x128xf32> -> vector<8x128xf32>
    %44 = arith.addf %40, %43 : vector<8x128xf32>
    %45 = arith.negf %44 : vector<8x128xf32>
    %46 = math.exp %45 : vector<8x128xf32>
    %cst_24 = arith.constant 1.000000e+00 : f32
    %47 = vector.broadcast %cst_24 : f32 to vector<8x128xf32>
    %48 = arith.addf %47, %46 : vector<8x128xf32>
    %49 = arith.divf %47, %48 : vector<8x128xf32>
    %50 = math.tanh %44 : vector<8x128xf32>
    %51 = vector.extract_strided_slice %49 {offsets = [0, 0], sizes = [8, 32], strides = [1, 1]} : vector<8x128xf32> to vector<8x32xf32>
    %52 = vector.extract_strided_slice %49 {offsets = [0, 32], sizes = [8, 32], strides = [1, 1]} : vector<8x128xf32> to vector<8x32xf32>
    %53 = vector.extract_strided_slice %50 {offsets = [0, 64], sizes = [8, 32], strides = [1, 1]} : vector<8x128xf32> to vector<8x32xf32>
    %54 = vector.extract_strided_slice %49 {offsets = [0, 96], sizes = [8, 32], strides = [1, 1]} : vector<8x128xf32> to vector<8x32xf32>
    %55 = arith.mulf %52, %31 : vector<8x32xf32>
    %56 = arith.mulf %51, %53 : vector<8x32xf32>
    %57 = arith.addf %55, %56 : vector<8x32xf32>
    %58 = math.tanh %57 : vector<8x32xf32>
    %59 = arith.mulf %54, %58 : vector<8x32xf32>
    %60 = arith.index_cast %c1_i32 : i32 to index
    %c0_25 = arith.constant 0 : index
    %c0_26 = arith.constant 0 : index
    %61 = vector.load %arg11[%60, %c0_25, %c0_26] : memref<8x8x32xf32, #tpu.memory_space<vmem>>, vector<1x8x32xf32>
    %62 = vector.shape_cast %61 : vector<1x8x32xf32> to vector<8x32xf32>
    %63 = vector.shape_cast %59 : vector<8x32xf32> to vector<1x8x32xf32>
    tpu.vector_store %arg11[%60, %c0_25, %c0_26], %63 {strides = array<i32>} : memref<8x8x32xf32, #tpu.memory_space<vmem>>, vector<1x8x32xf32>,
    %c2_i32 = arith.constant 2 : i32
    %64 = arith.index_cast %c2_i32 : i32 to index
    %c0_27 = arith.constant 0 : index
    %c0_28 = arith.constant 0 : index
    %65 = vector.load %arg10[%64, %c0_27, %c0_28] : memref<8x8x128xf32, #tpu.memory_space<vmem>>, vector<1x8x128xf32>
    %66 = vector.shape_cast %65 : vector<1x8x128xf32> to vector<8x128xf32>
    %67 = arith.truncf %59 : vector<8x32xf32> to vector<8x32xbf16>
    %c0_29 = arith.constant 0 : index
    %c0_30 = arith.constant 0 : index
    %68 = vector.load %arg3[%c0_29, %c0_30] : memref<32x128xbf16, #tpu.memory_space<vmem>>, vector<32x128xbf16>
    %cst_31 = arith.constant dense<0.000000e+00> : vector<8x128xf32>
    %69 = tpu.matmul %67, %68, %cst_31 {dimension_numbers = #tpu.dot_dimension_numbers<[1], [0], [0], [1], [0, 0, 1, 1], [], []>} : vector<8x32xbf16>, vector<32x128xbf16>, vector<8x128xf32> -> vector<8x128xf32>
    %70 = arith.addf %66, %69 : vector<8x128xf32>
    %71 = arith.negf %70 : vector<8x128xf32>
    %72 = math.exp %71 : vector<8x128xf32>
    %cst_32 = arith.constant 1.000000e+00 : f32
    %73 = vector.broadcast %cst_32 : f32 to vector<8x128xf32>
    %74 = arith.addf %73, %72 : vector<8x128xf32>
    %75 = arith.divf %73, %74 : vector<8x128xf32>
    %76 = math.tanh %70 : vector<8x128xf32>
    %77 = vector.extract_strided_slice %75 {offsets = [0, 0], sizes = [8, 32], strides = [1, 1]} : vector<8x128xf32> to vector<8x32xf32>
    %78 = vector.extract_strided_slice %75 {offsets = [0, 32], sizes = [8, 32], strides = [1, 1]} : vector<8x128xf32> to vector<8x32xf32>
    %79 = vector.extract_strided_slice %76 {offsets = [0, 64], sizes = [8, 32], strides = [1, 1]} : vector<8x128xf32> to vector<8x32xf32>
    %80 = vector.extract_strided_slice %75 {offsets = [0, 96], sizes = [8, 32], strides = [1, 1]} : vector<8x128xf32> to vector<8x32xf32>
    %81 = arith.mulf %78, %57 : vector<8x32xf32>
    %82 = arith.mulf %77, %79 : vector<8x32xf32>
    %83 = arith.addf %81, %82 : vector<8x32xf32>
    %84 = math.tanh %83 : vector<8x32xf32>
    %85 = arith.mulf %80, %84 : vector<8x32xf32>
    %86 = arith.index_cast %c2_i32 : i32 to index
    %c0_33 = arith.constant 0 : index
    %c0_34 = arith.constant 0 : index
    %87 = vector.load %arg11[%86, %c0_33, %c0_34] : memref<8x8x32xf32, #tpu.memory_space<vmem>>, vector<1x8x32xf32>
    %88 = vector.shape_cast %87 : vector<1x8x32xf32> to vector<8x32xf32>
    %89 = vector.shape_cast %85 : vector<8x32xf32> to vector<1x8x32xf32>
    tpu.vector_store %arg11[%86, %c0_33, %c0_34], %89 {strides = array<i32>} : memref<8x8x32xf32, #tpu.memory_space<vmem>>, vector<1x8x32xf32>,
    %c3_i32 = arith.constant 3 : i32
    %90 = arith.index_cast %c3_i32 : i32 to index
    %c0_35 = arith.constant 0 : index
    %c0_36 = arith.constant 0 : index
    %91 = vector.load %arg10[%90, %c0_35, %c0_36] : memref<8x8x128xf32, #tpu.memory_space<vmem>>, vector<1x8x128xf32>
    %92 = vector.shape_cast %91 : vector<1x8x128xf32> to vector<8x128xf32>
    %93 = arith.truncf %85 : vector<8x32xf32> to vector<8x32xbf16>
    %c0_37 = arith.constant 0 : index
    %c0_38 = arith.constant 0 : index
    %94 = vector.load %arg3[%c0_37, %c0_38] : memref<32x128xbf16, #tpu.memory_space<vmem>>, vector<32x128xbf16>
    %cst_39 = arith.constant dense<0.000000e+00> : vector<8x128xf32>
    %95 = tpu.matmul %93, %94, %cst_39 {dimension_numbers = #tpu.dot_dimension_numbers<[1], [0], [0], [1], [0, 0, 1, 1], [], []>} : vector<8x32xbf16>, vector<32x128xbf16>, vector<8x128xf32> -> vector<8x128xf32>
    %96 = arith.addf %92, %95 : vector<8x128xf32>
    %97 = arith.negf %96 : vector<8x128xf32>
    %98 = math.exp %97 : vector<8x128xf32>
    %cst_40 = arith.constant 1.000000e+00 : f32
    %99 = vector.broadcast %cst_40 : f32 to vector<8x128xf32>
    %100 = arith.addf %99, %98 : vector<8x128xf32>
    %101 = arith.divf %99, %100 : vector<8x128xf32>
    %102 = math.tanh %96 : vector<8x128xf32>
    %103 = vector.extract_strided_slice %101 {offsets = [0, 0], sizes = [8, 32], strides = [1, 1]} : vector<8x128xf32> to vector<8x32xf32>
    %104 = vector.extract_strided_slice %101 {offsets = [0, 32], sizes = [8, 32], strides = [1, 1]} : vector<8x128xf32> to vector<8x32xf32>
    %105 = vector.extract_strided_slice %102 {offsets = [0, 64], sizes = [8, 32], strides = [1, 1]} : vector<8x128xf32> to vector<8x32xf32>
    %106 = vector.extract_strided_slice %101 {offsets = [0, 96], sizes = [8, 32], strides = [1, 1]} : vector<8x128xf32> to vector<8x32xf32>
    %107 = arith.mulf %104, %83 : vector<8x32xf32>
    %108 = arith.mulf %103, %105 : vector<8x32xf32>
    %109 = arith.addf %107, %108 : vector<8x32xf32>
    %110 = math.tanh %109 : vector<8x32xf32>
    %111 = arith.mulf %106, %110 : vector<8x32xf32>
    %112 = arith.index_cast %c3_i32 : i32 to index
    %c0_41 = arith.constant 0 : index
    %c0_42 = arith.constant 0 : index
    %113 = vector.load %arg11[%112, %c0_41, %c0_42] : memref<8x8x32xf32, #tpu.memory_space<vmem>>, vector<1x8x32xf32>
    %114 = vector.shape_cast %113 : vector<1x8x32xf32> to vector<8x32xf32>
    %115 = vector.shape_cast %111 : vector<8x32xf32> to vector<1x8x32xf32>
    tpu.vector_store %arg11[%112, %c0_41, %c0_42], %115 {strides = array<i32>} : memref<8x8x32xf32, #tpu.memory_space<vmem>>, vector<1x8x32xf32>,
    %c4_i32 = arith.constant 4 : i32
    %116 = arith.index_cast %c4_i32 : i32 to index
    %c0_43 = arith.constant 0 : index
    %c0_44 = arith.constant 0 : index
    %117 = vector.load %arg10[%116, %c0_43, %c0_44] : memref<8x8x128xf32, #tpu.memory_space<vmem>>, vector<1x8x128xf32>
    %118 = vector.shape_cast %117 : vector<1x8x128xf32> to vector<8x128xf32>
    %119 = arith.truncf %111 : vector<8x32xf32> to vector<8x32xbf16>
    %c0_45 = arith.constant 0 : index
    %c0_46 = arith.constant 0 : index
    %120 = vector.load %arg3[%c0_45, %c0_46] : memref<32x128xbf16, #tpu.memory_space<vmem>>, vector<32x128xbf16>
    %cst_47 = arith.constant dense<0.000000e+00> : vector<8x128xf32>
    %121 = tpu.matmul %119, %120, %cst_47 {dimension_numbers = #tpu.dot_dimension_numbers<[1], [0], [0], [1], [0, 0, 1, 1], [], []>} : vector<8x32xbf16>, vector<32x128xbf16>, vector<8x128xf32> -> vector<8x128xf32>
    %122 = arith.addf %118, %121 : vector<8x128xf32>
    %123 = arith.negf %122 : vector<8x128xf32>
    %124 = math.exp %123 : vector<8x128xf32>
    %cst_48 = arith.constant 1.000000e+00 : f32
    %125 = vector.broadcast %cst_48 : f32 to vector<8x128xf32>
    %126 = arith.addf %125, %124 : vector<8x128xf32>
    %127 = arith.divf %125, %126 : vector<8x128xf32>
    %128 = math.tanh %122 : vector<8x128xf32>
    %129 = vector.extract_strided_slice %127 {offsets = [0, 0], sizes = [8, 32], strides = [1, 1]} : vector<8x128xf32> to vector<8x32xf32>
    %130 = vector.extract_strided_slice %127 {offsets = [0, 32], sizes = [8, 32], strides = [1, 1]} : vector<8x128xf32> to vector<8x32xf32>
    %131 = vector.extract_strided_slice %128 {offsets = [0, 64], sizes = [8, 32], strides = [1, 1]} : vector<8x128xf32> to vector<8x32xf32>
    %132 = vector.extract_strided_slice %127 {offsets = [0, 96], sizes = [8, 32], strides = [1, 1]} : vector<8x128xf32> to vector<8x32xf32>
    %133 = arith.mulf %130, %109 : vector<8x32xf32>
    %134 = arith.mulf %129, %131 : vector<8x32xf32>
    %135 = arith.addf %133, %134 : vector<8x32xf32>
    %136 = math.tanh %135 : vector<8x32xf32>
    %137 = arith.mulf %132, %136 : vector<8x32xf32>
    %138 = arith.index_cast %c4_i32 : i32 to index
    %c0_49 = arith.constant 0 : index
    %c0_50 = arith.constant 0 : index
    %139 = vector.load %arg11[%138, %c0_49, %c0_50] : memref<8x8x32xf32, #tpu.memory_space<vmem>>, vector<1x8x32xf32>
    %140 = vector.shape_cast %139 : vector<1x8x32xf32> to vector<8x32xf32>
    %141 = vector.shape_cast %137 : vector<8x32xf32> to vector<1x8x32xf32>
    tpu.vector_store %arg11[%138, %c0_49, %c0_50], %141 {strides = array<i32>} : memref<8x8x32xf32, #tpu.memory_space<vmem>>, vector<1x8x32xf32>,
    %c5_i32 = arith.constant 5 : i32
    %142 = arith.index_cast %c5_i32 : i32 to index
    %c0_51 = arith.constant 0 : index
    %c0_52 = arith.constant 0 : index
    %143 = vector.load %arg10[%142, %c0_51, %c0_52] : memref<8x8x128xf32, #tpu.memory_space<vmem>>, vector<1x8x128xf32>
    %144 = vector.shape_cast %143 : vector<1x8x128xf32> to vector<8x128xf32>
    %145 = arith.truncf %137 : vector<8x32xf32> to vector<8x32xbf16>
    %c0_53 = arith.constant 0 : index
    %c0_54 = arith.constant 0 : index
    %146 = vector.load %arg3[%c0_53, %c0_54] : memref<32x128xbf16, #tpu.memory_space<vmem>>, vector<32x128xbf16>
    %cst_55 = arith.constant dense<0.000000e+00> : vector<8x128xf32>
    %147 = tpu.matmul %145, %146, %cst_55 {dimension_numbers = #tpu.dot_dimension_numbers<[1], [0], [0], [1], [0, 0, 1, 1], [], []>} : vector<8x32xbf16>, vector<32x128xbf16>, vector<8x128xf32> -> vector<8x128xf32>
    %148 = arith.addf %144, %147 : vector<8x128xf32>
    %149 = arith.negf %148 : vector<8x128xf32>
    %150 = math.exp %149 : vector<8x128xf32>
    %cst_56 = arith.constant 1.000000e+00 : f32
    %151 = vector.broadcast %cst_56 : f32 to vector<8x128xf32>
    %152 = arith.addf %151, %150 : vector<8x128xf32>
    %153 = arith.divf %151, %152 : vector<8x128xf32>
    %154 = math.tanh %148 : vector<8x128xf32>
    %155 = vector.extract_strided_slice %153 {offsets = [0, 0], sizes = [8, 32], strides = [1, 1]} : vector<8x128xf32> to vector<8x32xf32>
    %156 = vector.extract_strided_slice %153 {offsets = [0, 32], sizes = [8, 32], strides = [1, 1]} : vector<8x128xf32> to vector<8x32xf32>
    %157 = vector.extract_strided_slice %154 {offsets = [0, 64], sizes = [8, 32], strides = [1, 1]} : vector<8x128xf32> to vector<8x32xf32>
    %158 = vector.extract_strided_slice %153 {offsets = [0, 96], sizes = [8, 32], strides = [1, 1]} : vector<8x128xf32> to vector<8x32xf32>
    %159 = arith.mulf %156, %135 : vector<8x32xf32>
    %160 = arith.mulf %155, %157 : vector<8x32xf32>
    %161 = arith.addf %159, %160 : vector<8x32xf32>
    %162 = math.tanh %161 : vector<8x32xf32>
    %163 = arith.mulf %158, %162 : vector<8x32xf32>
    %164 = arith.index_cast %c5_i32 : i32 to index
    %c0_57 = arith.constant 0 : index
    %c0_58 = arith.constant 0 : index
    %165 = vector.load %arg11[%164, %c0_57, %c0_58] : memref<8x8x32xf32, #tpu.memory_space<vmem>>, vector<1x8x32xf32>
    %166 = vector.shape_cast %165 : vector<1x8x32xf32> to vector<8x32xf32>
    %167 = vector.shape_cast %163 : vector<8x32xf32> to vector<1x8x32xf32>
    tpu.vector_store %arg11[%164, %c0_57, %c0_58], %167 {strides = array<i32>} : memref<8x8x32xf32, #tpu.memory_space<vmem>>, vector<1x8x32xf32>,
    %c6_i32 = arith.constant 6 : i32
    %168 = arith.index_cast %c6_i32 : i32 to index
    %c0_59 = arith.constant 0 : index
    %c0_60 = arith.constant 0 : index
    %169 = vector.load %arg10[%168, %c0_59, %c0_60] : memref<8x8x128xf32, #tpu.memory_space<vmem>>, vector<1x8x128xf32>
    %170 = vector.shape_cast %169 : vector<1x8x128xf32> to vector<8x128xf32>
    %171 = arith.truncf %163 : vector<8x32xf32> to vector<8x32xbf16>
    %c0_61 = arith.constant 0 : index
    %c0_62 = arith.constant 0 : index
    %172 = vector.load %arg3[%c0_61, %c0_62] : memref<32x128xbf16, #tpu.memory_space<vmem>>, vector<32x128xbf16>
    %cst_63 = arith.constant dense<0.000000e+00> : vector<8x128xf32>
    %173 = tpu.matmul %171, %172, %cst_63 {dimension_numbers = #tpu.dot_dimension_numbers<[1], [0], [0], [1], [0, 0, 1, 1], [], []>} : vector<8x32xbf16>, vector<32x128xbf16>, vector<8x128xf32> -> vector<8x128xf32>
    %174 = arith.addf %170, %173 : vector<8x128xf32>
    %175 = arith.negf %174 : vector<8x128xf32>
    %176 = math.exp %175 : vector<8x128xf32>
    %cst_64 = arith.constant 1.000000e+00 : f32
    %177 = vector.broadcast %cst_64 : f32 to vector<8x128xf32>
    %178 = arith.addf %177, %176 : vector<8x128xf32>
    %179 = arith.divf %177, %178 : vector<8x128xf32>
    %180 = math.tanh %174 : vector<8x128xf32>
    %181 = vector.extract_strided_slice %179 {offsets = [0, 0], sizes = [8, 32], strides = [1, 1]} : vector<8x128xf32> to vector<8x32xf32>
    %182 = vector.extract_strided_slice %179 {offsets = [0, 32], sizes = [8, 32], strides = [1, 1]} : vector<8x128xf32> to vector<8x32xf32>
    %183 = vector.extract_strided_slice %180 {offsets = [0, 64], sizes = [8, 32], strides = [1, 1]} : vector<8x128xf32> to vector<8x32xf32>
    %184 = vector.extract_strided_slice %179 {offsets = [0, 96], sizes = [8, 32], strides = [1, 1]} : vector<8x128xf32> to vector<8x32xf32>
    %185 = arith.mulf %182, %161 : vector<8x32xf32>
    %186 = arith.mulf %181, %183 : vector<8x32xf32>
    %187 = arith.addf %185, %186 : vector<8x32xf32>
    %188 = math.tanh %187 : vector<8x32xf32>
    %189 = arith.mulf %184, %188 : vector<8x32xf32>
    %190 = arith.index_cast %c6_i32 : i32 to index
    %c0_65 = arith.constant 0 : index
    %c0_66 = arith.constant 0 : index
    %191 = vector.load %arg11[%190, %c0_65, %c0_66] : memref<8x8x32xf32, #tpu.memory_space<vmem>>, vector<1x8x32xf32>
    %192 = vector.shape_cast %191 : vector<1x8x32xf32> to vector<8x32xf32>
    %193 = vector.shape_cast %189 : vector<8x32xf32> to vector<1x8x32xf32>
    tpu.vector_store %arg11[%190, %c0_65, %c0_66], %193 {strides = array<i32>} : memref<8x8x32xf32, #tpu.memory_space<vmem>>, vector<1x8x32xf32>,
    %c7_i32 = arith.constant 7 : i32
    %194 = arith.index_cast %c7_i32 : i32 to index
    %c0_67 = arith.constant 0 : index
    %c0_68 = arith.constant 0 : index
    %195 = vector.load %arg10[%194, %c0_67, %c0_68] : memref<8x8x128xf32, #tpu.memory_space<vmem>>, vector<1x8x128xf32>
    %196 = vector.shape_cast %195 : vector<1x8x128xf32> to vector<8x128xf32>
    %197 = arith.truncf %189 : vector<8x32xf32> to vector<8x32xbf16>
    %c0_69 = arith.constant 0 : index
    %c0_70 = arith.constant 0 : index
    %198 = vector.load %arg3[%c0_69, %c0_70] : memref<32x128xbf16, #tpu.memory_space<vmem>>, vector<32x128xbf16>
    %cst_71 = arith.constant dense<0.000000e+00> : vector<8x128xf32>
    %199 = tpu.matmul %197, %198, %cst_71 {dimension_numbers = #tpu.dot_dimension_numbers<[1], [0], [0], [1], [0, 0, 1, 1], [], []>} : vector<8x32xbf16>, vector<32x128xbf16>, vector<8x128xf32> -> vector<8x128xf32>
    %200 = arith.addf %196, %199 : vector<8x128xf32>
    %201 = arith.negf %200 : vector<8x128xf32>
    %202 = math.exp %201 : vector<8x128xf32>
    %cst_72 = arith.constant 1.000000e+00 : f32
    %203 = vector.broadcast %cst_72 : f32 to vector<8x128xf32>
    %204 = arith.addf %203, %202 : vector<8x128xf32>
    %205 = arith.divf %203, %204 : vector<8x128xf32>
    %206 = math.tanh %200 : vector<8x128xf32>
    %207 = vector.extract_strided_slice %205 {offsets = [0, 0], sizes = [8, 32], strides = [1, 1]} : vector<8x128xf32> to vector<8x32xf32>
    %208 = vector.extract_strided_slice %205 {offsets = [0, 32], sizes = [8, 32], strides = [1, 1]} : vector<8x128xf32> to vector<8x32xf32>
    %209 = vector.extract_strided_slice %206 {offsets = [0, 64], sizes = [8, 32], strides = [1, 1]} : vector<8x128xf32> to vector<8x32xf32>
    %210 = vector.extract_strided_slice %205 {offsets = [0, 96], sizes = [8, 32], strides = [1, 1]} : vector<8x128xf32> to vector<8x32xf32>
    %211 = arith.mulf %208, %187 : vector<8x32xf32>
    %212 = arith.mulf %207, %209 : vector<8x32xf32>
    %213 = arith.addf %211, %212 : vector<8x32xf32>
    %214 = math.tanh %213 : vector<8x32xf32>
    %215 = arith.mulf %210, %214 : vector<8x32xf32>
    %216 = arith.index_cast %c7_i32 : i32 to index
    %c0_73 = arith.constant 0 : index
    %c0_74 = arith.constant 0 : index
    %217 = vector.load %arg11[%216, %c0_73, %c0_74] : memref<8x8x32xf32, #tpu.memory_space<vmem>>, vector<1x8x32xf32>
    %218 = vector.shape_cast %217 : vector<1x8x32xf32> to vector<8x32xf32>
    %219 = vector.shape_cast %215 : vector<8x32xf32> to vector<1x8x32xf32>
    tpu.vector_store %arg11[%216, %c0_73, %c0_74], %219 {strides = array<i32>} : memref<8x8x32xf32, #tpu.memory_space<vmem>>, vector<1x8x32xf32>,
    %c8_i32 = arith.constant 8 : i32
    %c0_75 = arith.constant 0 : index
    %c0_76 = arith.constant 0 : index
    %c0_77 = arith.constant 0 : index
    %220 = vector.load %arg11[%c0_75, %c0_76, %c0_77] : memref<8x8x32xf32, #tpu.memory_space<vmem>>, vector<8x8x32xf32>
    %221 = vector.shape_cast %220 : vector<8x8x32xf32> to vector<64x32xf32>
    %222 = arith.truncf %221 : vector<64x32xf32> to vector<64x32xbf16>
    %c0_78 = arith.constant 0 : index
    %c0_79 = arith.constant 0 : index
    %223 = vector.load %arg2[%c0_78, %c0_79] : memref<32x128xbf16, #tpu.memory_space<vmem>>, vector<32x128xbf16>
    %cst_80 = arith.constant dense<0.000000e+00> : vector<64x128xf32>
    %224 = tpu.matmul %222, %223, %cst_80 {dimension_numbers = #tpu.dot_dimension_numbers<[1], [0], [0], [1], [0, 0, 1, 1], [], []>} : vector<64x32xbf16>, vector<32x128xbf16>, vector<64x128xf32> -> vector<64x128xf32>
    %c0_81 = arith.constant 0 : index
    %c0_82 = arith.constant 0 : index
    %225 = vector.load %arg6[%c0_81, %c0_82] : memref<1x128xf32, #tpu.memory_space<vmem>>, vector<1x128xf32>
    %226 = vector.broadcast %225 : vector<1x128xf32> to vector<64x128xf32>
    %227 = arith.addf %224, %226 : vector<64x128xf32>
    %228 = vector.shape_cast %227 : vector<64x128xf32> to vector<8x8x128xf32>
    %c0_83 = arith.constant 0 : index
    %c0_84 = arith.constant 0 : index
    %c0_85 = arith.constant 0 : index
    %229 = vector.load %arg10[%c0_83, %c0_84, %c0_85] : memref<8x8x128xf32, #tpu.memory_space<vmem>>, vector<8x8x128xf32>
    tpu.vector_store %arg10[%c0_83, %c0_84, %c0_85], %228 {strides = array<i32>} : memref<8x8x128xf32, #tpu.memory_space<vmem>>, vector<8x8x128xf32>,
    %cst_86 = arith.constant 0.000000e+00 : f32
    %230 = vector.broadcast %cst_86 : f32 to vector<8x32xf32>
    %cst_87 = arith.constant 0.000000e+00 : f32
    %231 = vector.broadcast %cst_87 : f32 to vector<8x32xf32>
    %c0_i32_88 = arith.constant 0 : i32
    %232 = arith.index_cast %c0_i32_88 : i32 to index
    %c0_89 = arith.constant 0 : index
    %c0_90 = arith.constant 0 : index
    %233 = vector.load %arg10[%232, %c0_89, %c0_90] : memref<8x8x128xf32, #tpu.memory_space<vmem>>, vector<1x8x128xf32>
    %234 = vector.shape_cast %233 : vector<1x8x128xf32> to vector<8x128xf32>
    %235 = arith.truncf %230 : vector<8x32xf32> to vector<8x32xbf16>
    %c0_91 = arith.constant 0 : index
    %c0_92 = arith.constant 0 : index
    %236 = vector.load %arg4[%c0_91, %c0_92] : memref<32x128xbf16, #tpu.memory_space<vmem>>, vector<32x128xbf16>
    %cst_93 = arith.constant dense<0.000000e+00> : vector<8x128xf32>
    %237 = tpu.matmul %235, %236, %cst_93 {dimension_numbers = #tpu.dot_dimension_numbers<[1], [0], [0], [1], [0, 0, 1, 1], [], []>} : vector<8x32xbf16>, vector<32x128xbf16>, vector<8x128xf32> -> vector<8x128xf32>
    %238 = arith.addf %234, %237 : vector<8x128xf32>
    %239 = arith.negf %238 : vector<8x128xf32>
    %240 = math.exp %239 : vector<8x128xf32>
    %cst_94 = arith.constant 1.000000e+00 : f32
    %241 = vector.broadcast %cst_94 : f32 to vector<8x128xf32>
    %242 = arith.addf %241, %240 : vector<8x128xf32>
    %243 = arith.divf %241, %242 : vector<8x128xf32>
    %244 = math.tanh %238 : vector<8x128xf32>
    %245 = vector.extract_strided_slice %243 {offsets = [0, 0], sizes = [8, 32], strides = [1, 1]} : vector<8x128xf32> to vector<8x32xf32>
    %246 = vector.extract_strided_slice %243 {offsets = [0, 32], sizes = [8, 32], strides = [1, 1]} : vector<8x128xf32> to vector<8x32xf32>
    %247 = vector.extract_strided_slice %244 {offsets = [0, 64], sizes = [8, 32], strides = [1, 1]} : vector<8x128xf32> to vector<8x32xf32>
    %248 = vector.extract_strided_slice %243 {offsets = [0, 96], sizes = [8, 32], strides = [1, 1]} : vector<8x128xf32> to vector<8x32xf32>
    %249 = arith.mulf %246, %231 : vector<8x32xf32>
    %250 = arith.mulf %245, %247 : vector<8x32xf32>
    %251 = arith.addf %249, %250 : vector<8x32xf32>
    %252 = math.tanh %251 : vector<8x32xf32>
    %253 = arith.mulf %248, %252 : vector<8x32xf32>
    %c1_i32_95 = arith.constant 1 : i32
    %254 = arith.index_cast %c1_i32_95 : i32 to index
    %c0_96 = arith.constant 0 : index
    %c0_97 = arith.constant 0 : index
    %255 = vector.load %arg10[%254, %c0_96, %c0_97] : memref<8x8x128xf32, #tpu.memory_space<vmem>>, vector<1x8x128xf32>
    %256 = vector.shape_cast %255 : vector<1x8x128xf32> to vector<8x128xf32>
    %257 = arith.truncf %253 : vector<8x32xf32> to vector<8x32xbf16>
    %c0_98 = arith.constant 0 : index
    %c0_99 = arith.constant 0 : index
    %258 = vector.load %arg4[%c0_98, %c0_99] : memref<32x128xbf16, #tpu.memory_space<vmem>>, vector<32x128xbf16>
    %cst_100 = arith.constant dense<0.000000e+00> : vector<8x128xf32>
    %259 = tpu.matmul %257, %258, %cst_100 {dimension_numbers = #tpu.dot_dimension_numbers<[1], [0], [0], [1], [0, 0, 1, 1], [], []>} : vector<8x32xbf16>, vector<32x128xbf16>, vector<8x128xf32> -> vector<8x128xf32>
    %260 = arith.addf %256, %259 : vector<8x128xf32>
    %261 = arith.negf %260 : vector<8x128xf32>
    %262 = math.exp %261 : vector<8x128xf32>
    %cst_101 = arith.constant 1.000000e+00 : f32
    %263 = vector.broadcast %cst_101 : f32 to vector<8x128xf32>
    %264 = arith.addf %263, %262 : vector<8x128xf32>
    %265 = arith.divf %263, %264 : vector<8x128xf32>
    %266 = math.tanh %260 : vector<8x128xf32>
    %267 = vector.extract_strided_slice %265 {offsets = [0, 0], sizes = [8, 32], strides = [1, 1]} : vector<8x128xf32> to vector<8x32xf32>
    %268 = vector.extract_strided_slice %265 {offsets = [0, 32], sizes = [8, 32], strides = [1, 1]} : vector<8x128xf32> to vector<8x32xf32>
    %269 = vector.extract_strided_slice %266 {offsets = [0, 64], sizes = [8, 32], strides = [1, 1]} : vector<8x128xf32> to vector<8x32xf32>
    %270 = vector.extract_strided_slice %265 {offsets = [0, 96], sizes = [8, 32], strides = [1, 1]} : vector<8x128xf32> to vector<8x32xf32>
    %271 = arith.mulf %268, %251 : vector<8x32xf32>
    %272 = arith.mulf %267, %269 : vector<8x32xf32>
    %273 = arith.addf %271, %272 : vector<8x32xf32>
    %274 = math.tanh %273 : vector<8x32xf32>
    %275 = arith.mulf %270, %274 : vector<8x32xf32>
    %c2_i32_102 = arith.constant 2 : i32
    %276 = arith.index_cast %c2_i32_102 : i32 to index
    %c0_103 = arith.constant 0 : index
    %c0_104 = arith.constant 0 : index
    %277 = vector.load %arg10[%276, %c0_103, %c0_104] : memref<8x8x128xf32, #tpu.memory_space<vmem>>, vector<1x8x128xf32>
    %278 = vector.shape_cast %277 : vector<1x8x128xf32> to vector<8x128xf32>
    %279 = arith.truncf %275 : vector<8x32xf32> to vector<8x32xbf16>
    %c0_105 = arith.constant 0 : index
    %c0_106 = arith.constant 0 : index
    %280 = vector.load %arg4[%c0_105, %c0_106] : memref<32x128xbf16, #tpu.memory_space<vmem>>, vector<32x128xbf16>
    %cst_107 = arith.constant dense<0.000000e+00> : vector<8x128xf32>
    %281 = tpu.matmul %279, %280, %cst_107 {dimension_numbers = #tpu.dot_dimension_numbers<[1], [0], [0], [1], [0, 0, 1, 1], [], []>} : vector<8x32xbf16>, vector<32x128xbf16>, vector<8x128xf32> -> vector<8x128xf32>
    %282 = arith.addf %278, %281 : vector<8x128xf32>
    %283 = arith.negf %282 : vector<8x128xf32>
    %284 = math.exp %283 : vector<8x128xf32>
    %cst_108 = arith.constant 1.000000e+00 : f32
    %285 = vector.broadcast %cst_108 : f32 to vector<8x128xf32>
    %286 = arith.addf %285, %284 : vector<8x128xf32>
    %287 = arith.divf %285, %286 : vector<8x128xf32>
    %288 = math.tanh %282 : vector<8x128xf32>
    %289 = vector.extract_strided_slice %287 {offsets = [0, 0], sizes = [8, 32], strides = [1, 1]} : vector<8x128xf32> to vector<8x32xf32>
    %290 = vector.extract_strided_slice %287 {offsets = [0, 32], sizes = [8, 32], strides = [1, 1]} : vector<8x128xf32> to vector<8x32xf32>
    %291 = vector.extract_strided_slice %288 {offsets = [0, 64], sizes = [8, 32], strides = [1, 1]} : vector<8x128xf32> to vector<8x32xf32>
    %292 = vector.extract_strided_slice %287 {offsets = [0, 96], sizes = [8, 32], strides = [1, 1]} : vector<8x128xf32> to vector<8x32xf32>
    %293 = arith.mulf %290, %273 : vector<8x32xf32>
    %294 = arith.mulf %289, %291 : vector<8x32xf32>
    %295 = arith.addf %293, %294 : vector<8x32xf32>
    %296 = math.tanh %295 : vector<8x32xf32>
    %297 = arith.mulf %292, %296 : vector<8x32xf32>
    %c3_i32_109 = arith.constant 3 : i32
    %298 = arith.index_cast %c3_i32_109 : i32 to index
    %c0_110 = arith.constant 0 : index
    %c0_111 = arith.constant 0 : index
    %299 = vector.load %arg10[%298, %c0_110, %c0_111] : memref<8x8x128xf32, #tpu.memory_space<vmem>>, vector<1x8x128xf32>
    %300 = vector.shape_cast %299 : vector<1x8x128xf32> to vector<8x128xf32>
    %301 = arith.truncf %297 : vector<8x32xf32> to vector<8x32xbf16>
    %c0_112 = arith.constant 0 : index
    %c0_113 = arith.constant 0 : index
    %302 = vector.load %arg4[%c0_112, %c0_113] : memref<32x128xbf16, #tpu.memory_space<vmem>>, vector<32x128xbf16>
    %cst_114 = arith.constant dense<0.000000e+00> : vector<8x128xf32>
    %303 = tpu.matmul %301, %302, %cst_114 {dimension_numbers = #tpu.dot_dimension_numbers<[1], [0], [0], [1], [0, 0, 1, 1], [], []>} : vector<8x32xbf16>, vector<32x128xbf16>, vector<8x128xf32> -> vector<8x128xf32>
    %304 = arith.addf %300, %303 : vector<8x128xf32>
    %305 = arith.negf %304 : vector<8x128xf32>
    %306 = math.exp %305 : vector<8x128xf32>
    %cst_115 = arith.constant 1.000000e+00 : f32
    %307 = vector.broadcast %cst_115 : f32 to vector<8x128xf32>
    %308 = arith.addf %307, %306 : vector<8x128xf32>
    %309 = arith.divf %307, %308 : vector<8x128xf32>
    %310 = math.tanh %304 : vector<8x128xf32>
    %311 = vector.extract_strided_slice %309 {offsets = [0, 0], sizes = [8, 32], strides = [1, 1]} : vector<8x128xf32> to vector<8x32xf32>
    %312 = vector.extract_strided_slice %309 {offsets = [0, 32], sizes = [8, 32], strides = [1, 1]} : vector<8x128xf32> to vector<8x32xf32>
    %313 = vector.extract_strided_slice %310 {offsets = [0, 64], sizes = [8, 32], strides = [1, 1]} : vector<8x128xf32> to vector<8x32xf32>
    %314 = vector.extract_strided_slice %309 {offsets = [0, 96], sizes = [8, 32], strides = [1, 1]} : vector<8x128xf32> to vector<8x32xf32>
    %315 = arith.mulf %312, %295 : vector<8x32xf32>
    %316 = arith.mulf %311, %313 : vector<8x32xf32>
    %317 = arith.addf %315, %316 : vector<8x32xf32>
    %318 = math.tanh %317 : vector<8x32xf32>
    %319 = arith.mulf %314, %318 : vector<8x32xf32>
    %c4_i32_116 = arith.constant 4 : i32
    %320 = arith.index_cast %c4_i32_116 : i32 to index
    %c0_117 = arith.constant 0 : index
    %c0_118 = arith.constant 0 : index
    %321 = vector.load %arg10[%320, %c0_117, %c0_118] : memref<8x8x128xf32, #tpu.memory_space<vmem>>, vector<1x8x128xf32>
    %322 = vector.shape_cast %321 : vector<1x8x128xf32> to vector<8x128xf32>
    %323 = arith.truncf %319 : vector<8x32xf32> to vector<8x32xbf16>
    %c0_119 = arith.constant 0 : index
    %c0_120 = arith.constant 0 : index
    %324 = vector.load %arg4[%c0_119, %c0_120] : memref<32x128xbf16, #tpu.memory_space<vmem>>, vector<32x128xbf16>
    %cst_121 = arith.constant dense<0.000000e+00> : vector<8x128xf32>
    %325 = tpu.matmul %323, %324, %cst_121 {dimension_numbers = #tpu.dot_dimension_numbers<[1], [0], [0], [1], [0, 0, 1, 1], [], []>} : vector<8x32xbf16>, vector<32x128xbf16>, vector<8x128xf32> -> vector<8x128xf32>
    %326 = arith.addf %322, %325 : vector<8x128xf32>
    %327 = arith.negf %326 : vector<8x128xf32>
    %328 = math.exp %327 : vector<8x128xf32>
    %cst_122 = arith.constant 1.000000e+00 : f32
    %329 = vector.broadcast %cst_122 : f32 to vector<8x128xf32>
    %330 = arith.addf %329, %328 : vector<8x128xf32>
    %331 = arith.divf %329, %330 : vector<8x128xf32>
    %332 = math.tanh %326 : vector<8x128xf32>
    %333 = vector.extract_strided_slice %331 {offsets = [0, 0], sizes = [8, 32], strides = [1, 1]} : vector<8x128xf32> to vector<8x32xf32>
    %334 = vector.extract_strided_slice %331 {offsets = [0, 32], sizes = [8, 32], strides = [1, 1]} : vector<8x128xf32> to vector<8x32xf32>
    %335 = vector.extract_strided_slice %332 {offsets = [0, 64], sizes = [8, 32], strides = [1, 1]} : vector<8x128xf32> to vector<8x32xf32>
    %336 = vector.extract_strided_slice %331 {offsets = [0, 96], sizes = [8, 32], strides = [1, 1]} : vector<8x128xf32> to vector<8x32xf32>
    %337 = arith.mulf %334, %317 : vector<8x32xf32>
    %338 = arith.mulf %333, %335 : vector<8x32xf32>
    %339 = arith.addf %337, %338 : vector<8x32xf32>
    %340 = math.tanh %339 : vector<8x32xf32>
    %341 = arith.mulf %336, %340 : vector<8x32xf32>
    %c5_i32_123 = arith.constant 5 : i32
    %342 = arith.index_cast %c5_i32_123 : i32 to index
    %c0_124 = arith.constant 0 : index
    %c0_125 = arith.constant 0 : index
    %343 = vector.load %arg10[%342, %c0_124, %c0_125] : memref<8x8x128xf32, #tpu.memory_space<vmem>>, vector<1x8x128xf32>
    %344 = vector.shape_cast %343 : vector<1x8x128xf32> to vector<8x128xf32>
    %345 = arith.truncf %341 : vector<8x32xf32> to vector<8x32xbf16>
    %c0_126 = arith.constant 0 : index
    %c0_127 = arith.constant 0 : index
    %346 = vector.load %arg4[%c0_126, %c0_127] : memref<32x128xbf16, #tpu.memory_space<vmem>>, vector<32x128xbf16>
    %cst_128 = arith.constant dense<0.000000e+00> : vector<8x128xf32>
    %347 = tpu.matmul %345, %346, %cst_128 {dimension_numbers = #tpu.dot_dimension_numbers<[1], [0], [0], [1], [0, 0, 1, 1], [], []>} : vector<8x32xbf16>, vector<32x128xbf16>, vector<8x128xf32> -> vector<8x128xf32>
    %348 = arith.addf %344, %347 : vector<8x128xf32>
    %349 = arith.negf %348 : vector<8x128xf32>
    %350 = math.exp %349 : vector<8x128xf32>
    %cst_129 = arith.constant 1.000000e+00 : f32
    %351 = vector.broadcast %cst_129 : f32 to vector<8x128xf32>
    %352 = arith.addf %351, %350 : vector<8x128xf32>
    %353 = arith.divf %351, %352 : vector<8x128xf32>
    %354 = math.tanh %348 : vector<8x128xf32>
    %355 = vector.extract_strided_slice %353 {offsets = [0, 0], sizes = [8, 32], strides = [1, 1]} : vector<8x128xf32> to vector<8x32xf32>
    %356 = vector.extract_strided_slice %353 {offsets = [0, 32], sizes = [8, 32], strides = [1, 1]} : vector<8x128xf32> to vector<8x32xf32>
    %357 = vector.extract_strided_slice %354 {offsets = [0, 64], sizes = [8, 32], strides = [1, 1]} : vector<8x128xf32> to vector<8x32xf32>
    %358 = vector.extract_strided_slice %353 {offsets = [0, 96], sizes = [8, 32], strides = [1, 1]} : vector<8x128xf32> to vector<8x32xf32>
    %359 = arith.mulf %356, %339 : vector<8x32xf32>
    %360 = arith.mulf %355, %357 : vector<8x32xf32>
    %361 = arith.addf %359, %360 : vector<8x32xf32>
    %362 = math.tanh %361 : vector<8x32xf32>
    %363 = arith.mulf %358, %362 : vector<8x32xf32>
    %c6_i32_130 = arith.constant 6 : i32
    %364 = arith.index_cast %c6_i32_130 : i32 to index
    %c0_131 = arith.constant 0 : index
    %c0_132 = arith.constant 0 : index
    %365 = vector.load %arg10[%364, %c0_131, %c0_132] : memref<8x8x128xf32, #tpu.memory_space<vmem>>, vector<1x8x128xf32>
    %366 = vector.shape_cast %365 : vector<1x8x128xf32> to vector<8x128xf32>
    %367 = arith.truncf %363 : vector<8x32xf32> to vector<8x32xbf16>
    %c0_133 = arith.constant 0 : index
    %c0_134 = arith.constant 0 : index
    %368 = vector.load %arg4[%c0_133, %c0_134] : memref<32x128xbf16, #tpu.memory_space<vmem>>, vector<32x128xbf16>
    %cst_135 = arith.constant dense<0.000000e+00> : vector<8x128xf32>
    %369 = tpu.matmul %367, %368, %cst_135 {dimension_numbers = #tpu.dot_dimension_numbers<[1], [0], [0], [1], [0, 0, 1, 1], [], []>} : vector<8x32xbf16>, vector<32x128xbf16>, vector<8x128xf32> -> vector<8x128xf32>
    %370 = arith.addf %366, %369 : vector<8x128xf32>
    %371 = arith.negf %370 : vector<8x128xf32>
    %372 = math.exp %371 : vector<8x128xf32>
    %cst_136 = arith.constant 1.000000e+00 : f32
    %373 = vector.broadcast %cst_136 : f32 to vector<8x128xf32>
    %374 = arith.addf %373, %372 : vector<8x128xf32>
    %375 = arith.divf %373, %374 : vector<8x128xf32>
    %376 = math.tanh %370 : vector<8x128xf32>
    %377 = vector.extract_strided_slice %375 {offsets = [0, 0], sizes = [8, 32], strides = [1, 1]} : vector<8x128xf32> to vector<8x32xf32>
    %378 = vector.extract_strided_slice %375 {offsets = [0, 32], sizes = [8, 32], strides = [1, 1]} : vector<8x128xf32> to vector<8x32xf32>
    %379 = vector.extract_strided_slice %376 {offsets = [0, 64], sizes = [8, 32], strides = [1, 1]} : vector<8x128xf32> to vector<8x32xf32>
    %380 = vector.extract_strided_slice %375 {offsets = [0, 96], sizes = [8, 32], strides = [1, 1]} : vector<8x128xf32> to vector<8x32xf32>
    %381 = arith.mulf %378, %361 : vector<8x32xf32>
    %382 = arith.mulf %377, %379 : vector<8x32xf32>
    %383 = arith.addf %381, %382 : vector<8x32xf32>
    %384 = math.tanh %383 : vector<8x32xf32>
    %385 = arith.mulf %380, %384 : vector<8x32xf32>
    %c7_i32_137 = arith.constant 7 : i32
    %386 = arith.index_cast %c7_i32_137 : i32 to index
    %c0_138 = arith.constant 0 : index
    %c0_139 = arith.constant 0 : index
    %387 = vector.load %arg10[%386, %c0_138, %c0_139] : memref<8x8x128xf32, #tpu.memory_space<vmem>>, vector<1x8x128xf32>
    %388 = vector.shape_cast %387 : vector<1x8x128xf32> to vector<8x128xf32>
    %389 = arith.truncf %385 : vector<8x32xf32> to vector<8x32xbf16>
    %c0_140 = arith.constant 0 : index
    %c0_141 = arith.constant 0 : index
    %390 = vector.load %arg4[%c0_140, %c0_141] : memref<32x128xbf16, #tpu.memory_space<vmem>>, vector<32x128xbf16>
    %cst_142 = arith.constant dense<0.000000e+00> : vector<8x128xf32>
    %391 = tpu.matmul %389, %390, %cst_142 {dimension_numbers = #tpu.dot_dimension_numbers<[1], [0], [0], [1], [0, 0, 1, 1], [], []>} : vector<8x32xbf16>, vector<32x128xbf16>, vector<8x128xf32> -> vector<8x128xf32>
    %392 = arith.addf %388, %391 : vector<8x128xf32>
    %393 = arith.negf %392 : vector<8x128xf32>
    %394 = math.exp %393 : vector<8x128xf32>
    %cst_143 = arith.constant 1.000000e+00 : f32
    %395 = vector.broadcast %cst_143 : f32 to vector<8x128xf32>
    %396 = arith.addf %395, %394 : vector<8x128xf32>
    %397 = arith.divf %395, %396 : vector<8x128xf32>
    %398 = math.tanh %392 : vector<8x128xf32>
    %399 = vector.extract_strided_slice %397 {offsets = [0, 0], sizes = [8, 32], strides = [1, 1]} : vector<8x128xf32> to vector<8x32xf32>
    %400 = vector.extract_strided_slice %397 {offsets = [0, 32], sizes = [8, 32], strides = [1, 1]} : vector<8x128xf32> to vector<8x32xf32>
    %401 = vector.extract_strided_slice %398 {offsets = [0, 64], sizes = [8, 32], strides = [1, 1]} : vector<8x128xf32> to vector<8x32xf32>
    %402 = vector.extract_strided_slice %397 {offsets = [0, 96], sizes = [8, 32], strides = [1, 1]} : vector<8x128xf32> to vector<8x32xf32>
    %403 = arith.mulf %400, %383 : vector<8x32xf32>
    %404 = arith.mulf %399, %401 : vector<8x32xf32>
    %405 = arith.addf %403, %404 : vector<8x32xf32>
    %406 = math.tanh %405 : vector<8x32xf32>
    %407 = arith.mulf %402, %406 : vector<8x32xf32>
    %c8_i32_144 = arith.constant 8 : i32
    %408 = tpu.concatenate %215, %407 in 0 : vector<8x32xf32>, vector<8x32xf32> -> vector<16x32xf32>
    %409 = arith.truncf %408 : vector<16x32xf32> to vector<16x32xbf16>
    %c0_145 = arith.constant 0 : index
    %c0_146 = arith.constant 0 : index
    %410 = vector.load %arg7[%c0_145, %c0_146] : memref<32x1xbf16, #tpu.memory_space<vmem>>, vector<32x1xbf16>
    %cst_147 = arith.constant dense<0.000000e+00> : vector<16x1xf32>
    %411 = tpu.matmul %409, %410, %cst_147 {dimension_numbers = #tpu.dot_dimension_numbers<[1], [0], [0], [1], [0, 0, 1, 1], [], []>} : vector<16x32xbf16>, vector<32x1xbf16>, vector<16x1xf32> -> vector<16x1xf32>
    %c0_148 = arith.constant 0 : index
    %c0_149 = arith.constant 0 : index
    %412 = vector.load %arg8[%c0_148, %c0_149] : memref<1x1xf32, #tpu.memory_space<vmem>>, vector<1x1xf32>
    %413 = vector.broadcast %412 : vector<1x1xf32> to vector<16x1xf32>
    %414 = arith.addf %411, %413 : vector<16x1xf32>
    %c0_150 = arith.constant 0 : index
    %c0_151 = arith.constant 0 : index
    %415 = vector.load %arg9[%c0_150, %c0_151] : memref<16x1xf32, #tpu.memory_space<vmem>>, vector<16x1xf32>
    tpu.vector_store %arg9[%c0_150, %c0_151], %414 {strides = array<i32>} : memref<16x1xf32, #tpu.memory_space<vmem>>, vector<16x1xf32>,
    return
  }
}

</mosaic_0001>

<llo_original>
// kernel: lstm_predictor_forward.1
$region0: #{lstm_predictor_forward.1}
  #allocation0 [shape = 'u32[]', space=smem, size = 0x4, offset = 0x4, fixed_abs, tag = 'smem constant byte address 0x4 - core index']
  #allocation1 [shape = 'u32[144,128]{1,0:T(1,128)}', space=vmem, size = 0x12000, scoped, tag = 'internal scratch']
  #allocation2 [shape = 'f32[8,8,128]{2,1,0:T(8,128)}', space=vmem, size = 0x8000, scoped, tag = 'scratch operand']
  #allocation3 [shape = 'f32[8,8,32]{2,1,0:T(8,128)}', space=vmem, size = 0x8000, scoped, tag = 'scratch operand']
  #allocation4 [shape = 'f32[1,1]{1,0:T(1,128)S(1)}', space=vmem, size = 0x200, scoped, tag = 'scoped memory for lstm_predictor_forward.1']
  %s0 = inlined_call_operand.vmem [shape: f32[8,8,4], index: 0, kind: input, shape index: {}]
  %s1 = inlined_call_operand.vmem [shape: bf16[4,128], index: 1, kind: input, shape index: {}]
  %s2 = inlined_call_operand.vmem [shape: bf16[32,128], index: 2, kind: input, shape index: {}]
  %s3 = inlined_call_operand.vmem [shape: bf16[32,128], index: 3, kind: input, shape index: {}]
  %s4 = inlined_call_operand.vmem [shape: bf16[32,128], index: 4, kind: input, shape index: {}]
  %s5 = inlined_call_operand.vmem [shape: f32[1,128], index: 5, kind: input, shape index: {}]
  %s6 = inlined_call_operand.vmem [shape: f32[1,128], index: 6, kind: input, shape index: {}]
  %s7 = inlined_call_operand.vmem [shape: bf16[32,1], index: 7, kind: input, shape index: {}]
  %s8 = inlined_call_operand.<no memory space> [shape: f32[1,1], index: 8, kind: input, shape index: {}]
  %s9 = inlined_call_operand.vmem [shape: f32[16,1], index: 9, kind: output, shape index: {}]
  %s10 = sld [smem:[#allocation0]]
  $region46: #{lstm_predictor_forward.1} parent=0
    _
  %s12 = ssub.s32 1, %s10
  %s13 = scalar_select 0, %s12, %s10
  %v14 = vstv %s8
  %15 = vst [vmem:[#allocation4] sm:$0x1] %v14
  // Predicated region
  $region2: #{lstm_predictor_forward.1} parent=0 // pred_check
    _
  $region3: #{lstm_predictor_forward.1} parent=0 // pred_check_branch
    %17 = sbr.rel (0) target = $region5
  $region4: #{lstm_predictor_forward.1} parent=0 // pred_region
    _
  $region5: #{lstm_predictor_forward.1} parent=0 // pred_fallthru
    _
  // Predicated region
  $region6: #{lstm_predictor_forward.1} parent=0 // pred_check
    _
  $region7: #{lstm_predictor_forward.1} parent=0 // pred_check_branch
    %19 = sbr.rel (0) target = $region9
  $region8: #{lstm_predictor_forward.1} parent=0 // pred_region
    _
  $region9: #{lstm_predictor_forward.1} parent=0 // pred_fallthru
    _
  // Predicated region
  $region10: #{lstm_predictor_forward.1} parent=0 // pred_check
    _
  $region11: #{lstm_predictor_forward.1} parent=0 // pred_check_branch
    %21 = sbr.rel (0) target = $region13
  $region12: #{lstm_predictor_forward.1} parent=0 // pred_region
    _
  $region13: #{lstm_predictor_forward.1} parent=0 // pred_fallthru
    _
  // Predicated region
  $region14: #{lstm_predictor_forward.1} parent=0 // pred_check
    _
  $region15: #{lstm_predictor_forward.1} parent=0 // pred_check_branch
    %23 = sbr.rel (0) target = $region17
  $region16: #{lstm_predictor_forward.1} parent=0 // pred_region
    _
  $region17: #{lstm_predictor_forward.1} parent=0 // pred_fallthru
    _
  // Predicated region
  $region18: #{lstm_predictor_forward.1} parent=0 // pred_check
    _
  $region19: #{lstm_predictor_forward.1} parent=0 // pred_check_branch
    %25 = sbr.rel (0) target = $region21
  $region20: #{lstm_predictor_forward.1} parent=0 // pred_region
    _
  $region21: #{lstm_predictor_forward.1} parent=0 // pred_fallthru
    _
  // Predicated region
  $region22: #{lstm_predictor_forward.1} parent=0 // pred_check
    _
  $region23: #{lstm_predictor_forward.1} parent=0 // pred_check_branch
    %27 = sbr.rel (0) target = $region25
  $region24: #{lstm_predictor_forward.1} parent=0 // pred_region
    _
  $region25: #{lstm_predictor_forward.1} parent=0 // pred_fallthru
    _
  // Predicated region
  $region26: #{lstm_predictor_forward.1} parent=0 // pred_check
    _
  $region27: #{lstm_predictor_forward.1} parent=0 // pred_check_branch
    %29 = sbr.rel (0) target = $region29
  $region28: #{lstm_predictor_forward.1} parent=0 // pred_region
    _
  $region29: #{lstm_predictor_forward.1} parent=0 // pred_fallthru
    _
  // Predicated region
  $region30: #{lstm_predictor_forward.1} parent=0 // pred_check
    _
  $region31: #{lstm_predictor_forward.1} parent=0 // pred_check_branch
    %31 = sbr.rel (0) target = $region33
  $region32: #{lstm_predictor_forward.1} parent=0 // pred_region
    _
  $region33: #{lstm_predictor_forward.1} parent=0 // pred_fallthru
    _
  // Predicated region
  $region34: #{lstm_predictor_forward.1} parent=0 // pred_check
    _
  $region35: #{lstm_predictor_forward.1} parent=0 // pred_check_branch
    %33 = sbr.rel (0) target = $region37
  $region36: #{lstm_predictor_forward.1} parent=0 // pred_region
    _
  $region37: #{lstm_predictor_forward.1} parent=0 // pred_fallthru
    _
  %v35 = vld [vmem:[%s0] sm:$0xff]
  %v36 = vld [vmem:[%s0 + $0x8] sm:$0xff]
  %v37 = vld [vmem:[%s0 + $0x10] sm:$0xff]
  %v38 = vld [vmem:[%s0 + $0x18] sm:$0xff]
  %v39 = vld [vmem:[%s0 + $0x20] sm:$0xff]
  %v40 = vld [vmem:[%s0 + $0x28] sm:$0xff]
  %v41 = vld [vmem:[%s0 + $0x30] sm:$0xff]
  %v42 = vld [vmem:[%s0 + $0x38] sm:$0xff]
  %v43 = vpack.c.bf16 %v36, %v35
  %v44 = vpack.c.bf16 %v38, %v37
  %v45 = vpack.c.bf16 %v40, %v39
  %v46 = vpack.c.bf16 %v42, %v41
  %v47 = vld [vmem:[%s1] sm:$0x3]
  %v48 = vld [vmem:[%s5] sm:$0x1]
  %v50 = vlaneseq
  %v51 = vshrl.u32 %v50, 7
  %v52 = vsub.s32 0, %v51
  %v53 = vrot.slane %v48, %v52
  %vm55 = vcmask 31744
  %v57 = vsel %vm55, %v43, 0
  %v60 = vsel %vm55, %v44, 0
  %v63 = vsel %vm55, %v45, 0
  %v66 = vsel %vm55, %v46, 0
  %vm68 = vcmask 1041408
  %v70 = vsel %vm68, %v47, 0
  %72 = vmatprep.subr.bf16.mxu0 0
  %73 = vmatpush1.bf16.msra.mxu0 %v70
  %74 = vmatprep.subr.bf16.mxu0 0
  %75 = vmatpush1.bf16.msra.mxu0 0
  %76 = vmatprep.subr.bf16.mxu0 0
  %77 = vmatpush1.bf16.msra.mxu0 0
  %78 = vmatprep.subr.bf16.mxu0 0
  %79 = vmatpush1.bf16.msra.mxu0 0
  %80 = vmatprep.subr.bf16.mxu0 0
  %81 = vmatpush1.bf16.msra.mxu0 0
  %82 = vmatprep.subr.bf16.mxu0 0
  %83 = vmatpush1.bf16.msra.mxu0 0
  %84 = vmatprep.subr.bf16.mxu0 0
  %85 = vmatpush1.bf16.msra.mxu0 0
  %86 = vmatprep.subr.bf16.mxu0 0
  %87 = vmatpush1.bf16.msra.mxu0 0
  %88 = vmatprep.subr.bf16.mxu0 0
  %89 = vmatpush1.bf16.msra.mxu0 0
  %90 = vmatprep.subr.bf16.mxu0 0
  %91 = vmatpush1.bf16.msra.mxu0 0
  %92 = vmatprep.subr.bf16.mxu0 0
  %93 = vmatpush1.bf16.msra.mxu0 0
  %94 = vmatprep.subr.bf16.mxu0 0
  %95 = vmatpush1.bf16.msra.mxu0 0
  %96 = vmatprep.subr.bf16.mxu0 0
  %97 = vmatpush1.bf16.msra.mxu0 0
  %98 = vmatprep.subr.bf16.mxu0 0
  %99 = vmatpush1.bf16.msra.mxu0 0
  %100 = vmatprep.subr.bf16.mxu0 0
  %101 = vmatpush1.bf16.msra.mxu0 0
  %102 = vmatprep.subr.bf16.mxu0 0
  %103 = vmatpush1.bf16.msra.mxu0 0
  %104 = vmatprep.mubr.bf16.mxu0 0
  %105 = vmatmul.mubr.bf16.gmra.mrb[0].mxu0 %v57
  %v106 = vpop.f32.mrb[0].mxu0
  %v107 = vadd.f32 %v53, %v106
  %v108 = vpop.f32.mrb[0].mxu0
  %v109 = vpop.f32.mrb[0].mxu0
  %v110 = vadd.f32 %v53, %v109
  %v111 = vpop.f32.mrb[0].mxu0
  %112 = vmatprep.mubr.bf16.mxu0 0
  %113 = vmatmul.mubr.bf16.gmra.mrb[0].mxu0 %v60
  %v114 = vpop.f32.mrb[0].mxu0
  %v115 = vadd.f32 %v53, %v114
  %v116 = vpop.f32.mrb[0].mxu0
  %v117 = vpop.f32.mrb[0].mxu0
  %v118 = vadd.f32 %v53, %v117
  %v119 = vpop.f32.mrb[0].mxu0
  %120 = vmatprep.mubr.bf16.mxu0 0
  %121 = vmatmul.mubr.bf16.gmra.mrb[0].mxu0 %v63
  %v122 = vpop.f32.mrb[0].mxu0
  %v123 = vadd.f32 %v53, %v122
  %v124 = vpop.f32.mrb[0].mxu0
  %v125 = vpop.f32.mrb[0].mxu0
  %v126 = vadd.f32 %v53, %v125
  %v127 = vpop.f32.mrb[0].mxu0
  %128 = vmatprep.mubr.bf16.mxu0 0
  %129 = vmatmul.mubr.bf16.gmra.mrb[0].mxu0 %v66
  %v130 = vpop.f32.mrb[0].mxu0
  %v131 = vadd.f32 %v53, %v130
  %v132 = vpop.f32.mrb[0].mxu0
  %v133 = vpop.f32.mrb[0].mxu0
  %v134 = vadd.f32 %v53, %v133
  %v135 = vpop.f32.mrb[0].mxu0
  %136 = vdwg.mxu0
  %137 = vst [vmem:[#allocation2] sm:$0xff] %v107
  %138 = vst [vmem:[#allocation2 + $0x8] sm:$0xff] %v110
  %139 = vst [vmem:[#allocation2 + $0x10] sm:$0xff] %v115
  %140 = vst [vmem:[#allocation2 + $0x18] sm:$0xff] %v118
  %141 = vst [vmem:[#allocation2 + $0x20] sm:$0xff] %v123
  %142 = vst [vmem:[#allocation2 + $0x28] sm:$0xff] %v126
  %143 = vst [vmem:[#allocation2 + $0x30] sm:$0xff] %v131
  %144 = vst [vmem:[#allocation2 + $0x38] sm:$0xff] %v134
  %v145 = vld [vmem:[#allocation2] sm:$0xff]
  %v146 = vld [vmem:[%s3] sm:$0xf]
  %v147 = vld [vmem:[%s3 + $0x4] sm:$0xf]
  %v148 = vld [vmem:[%s3 + $0x8] sm:$0xf]
  %v149 = vld [vmem:[%s3 + $0xc] sm:$0xf]
  %v154 = vunpack.c.l.b16 %v146
  %v155 = vunpack.c.l.b16 %v147
  %v156 = vunpack.c.l.b16 %v148
  %v157 = vunpack.c.l.b16 %v149
  %v158 = vpack.c.b16 %v155, %v154
  %v159 = vpack.c.b16 %v157, %v156
  %vm162 = vcmask 261120
  %v164 = vsel %vm162, 0, 0
  %166 = vmatprep.subr.bf16.mxu0 0
  %167 = vmatpush1.bf16.msra.mxu0 %v158
  %168 = vmatprep.subr.bf16.mxu0 0
  %169 = vmatpush1.bf16.msra.mxu0 %v159
  %170 = vmatprep.subr.bf16.mxu0 0
  %171 = vmatpush1.bf16.msra.mxu0 0
  %172 = vmatprep.subr.bf16.mxu0 0
  %173 = vmatpush1.bf16.msra.mxu0 0
  %174 = vmatprep.subr.bf16.mxu0 0
  %175 = vmatpush1.bf16.msra.mxu0 0
  %176 = vmatprep.subr.bf16.mxu0 0
  %177 = vmatpush1.bf16.msra.mxu0 0
  %178 = vmatprep.subr.bf16.mxu0 0
  %179 = vmatpush1.bf16.msra.mxu0 0
  %180 = vmatprep.subr.bf16.mxu0 0
  %181 = vmatpush1.bf16.msra.mxu0 0
  %182 = vmatprep.subr.bf16.mxu0 0
  %183 = vmatpush1.bf16.msra.mxu0 0
  %184 = vmatprep.subr.bf16.mxu0 0
  %185 = vmatpush1.bf16.msra.mxu0 0
  %186 = vmatprep.subr.bf16.mxu0 0
  %187 = vmatpush1.bf16.msra.mxu0 0
  %188 = vmatprep.subr.bf16.mxu0 0
  %189 = vmatpush1.bf16.msra.mxu0 0
  %190 = vmatprep.subr.bf16.mxu0 0
  %191 = vmatpush1.bf16.msra.mxu0 0
  %192 = vmatprep.subr.bf16.mxu0 0
  %193 = vmatpush1.bf16.msra.mxu0 0
  %194 = vmatprep.subr.bf16.mxu0 0
  %195 = vmatpush1.bf16.msra.mxu0 0
  %196 = vmatprep.subr.bf16.mxu0 0
  %197 = vmatpush1.bf16.msra.mxu0 0
  %198 = vmatprep.mubr.bf16.mxu0 0
  %199 = vmatmul.mubr.bf16.gmra.mrb[0].mxu0 %v164
  %v200 = vpop.f32.mrb[0].mxu0
  %v201 = vadd.f32 0.0, %v200
  %v202 = vpop.f32.mrb[0].mxu0
  %v203 = vpop.f32.mrb[0].mxu0
  %v204 = vpop.f32.mrb[0].mxu0
  %205 = vdwg.mxu0
  %v206 = vadd.f32 %v145, %v201
  %v207 = vxor.u32 %v206, 2147483648
  %v208 = vmul.f32 %v207, 1.442695
  %v209 = vpow.pop %v208
  %v210 = vadd.f32 %v209, 1.0
  %v211 = vrcp.pop %v210
  %v212 = vmul.f32 1.0, %v211
  %v213 = vtanh.pop %v206
  %v214 = vmul.f32 %v212, 0.0
  %216 = vrot.lane.b32.xlu0 %v213, 64
  %v217 = vpop.permute.xlu0 %216
  %v219 = vmul.f32 %v212, %v217
  %221 = vrot.lane.b32.xlu0 %v219, 32
  %v222 = vpop.permute.xlu0 %221
  %v224 = vadd.f32 %v214, %v222
  %v225 = vtanh.pop %v224
  %227 = vrot.lane.b32.xlu0 %v225, 64
  %v228 = vpop.permute.xlu0 %227
  %v230 = vmul.f32 %v212, %v228
  %232 = vrot.lane.b32.xlu0 %v230, 32
  %v233 = vpop.permute.xlu0 %232
  %235 = vst.msk [vmem:[#allocation3] sm:$0xff] %vm162, %v233
  %s236 = scalar_lea.vmem [#allocation2], 8
  %v237 = vld [vmem:[%s236] sm:$0xff]
  %v238 = vpack.c.bf16 %v230, %v230
  %v239 = vld [vmem:[%s3] sm:$0xf]
  %v240 = vld [vmem:[%s3 + $0x4] sm:$0xf]
  %v241 = vld [vmem:[%s3 + $0x8] sm:$0xf]
  %v242 = vld [vmem:[%s3 + $0xc] sm:$0xf]
  %244 = vrot.lane.b32.xlu0 %v238, 32
  %v245 = vpop.permute.xlu0 %244
  %v250 = vunpack.c.l.b16 %v239
  %v251 = vunpack.c.l.b16 %v240
  %v252 = vunpack.c.l.b16 %v241
  %v253 = vunpack.c.l.b16 %v242
  %v254 = vpack.c.b16 %v251, %v250
  %v255 = vpack.c.b16 %v253, %v252
  %v259 = vsel %vm162, %v245, 0
  %261 = vmatprep.subr.bf16.mxu0 0
  %262 = vmatpush1.bf16.msra.mxu0 %v254
  %263 = vmatprep.subr.bf16.mxu0 0
  %264 = vmatpush1.bf16.msra.mxu0 %v255
  %265 = vmatprep.subr.bf16.mxu0 0
  %266 = vmatpush1.bf16.msra.mxu0 0
  %267 = vmatprep.subr.bf16.mxu0 0
  %268 = vmatpush1.bf16.msra.mxu0 0
  %269 = vmatprep.subr.bf16.mxu0 0
  %270 = vmatpush1.bf16.msra.mxu0 0
  %271 = vmatprep.subr.bf16.mxu0 0
  %272 = vmatpush1.bf16.msra.mxu0 0
  %273 = vmatprep.subr.bf16.mxu0 0
  %274 = vmatpush1.bf16.msra.mxu0 0
  %275 = vmatprep.subr.bf16.mxu0 0
  %276 = vmatpush1.bf16.msra.mxu0 0
  %277 = vmatprep.subr.bf16.mxu0 0
  %278 = vmatpush1.bf16.msra.mxu0 0
  %279 = vmatprep.subr.bf16.mxu0 0
  %280 = vmatpush1.bf16.msra.mxu0 0
  %281 = vmatprep.subr.bf16.mxu0 0
  %282 = vmatpush1.bf16.msra.mxu0 0
  %283 = vmatprep.subr.bf16.mxu0 0
  %284 = vmatpush1.bf16.msra.mxu0 0
  %285 = vmatprep.subr.bf16.mxu0 0
  %286 = vmatpush1.bf16.msra.mxu0 0
  %287 = vmatprep.subr.bf16.mxu0 0
  %288 = vmatpush1.bf16.msra.mxu0 0
  %289 = vmatprep.subr.bf16.mxu0 0
  %290 = vmatpush1.bf16.msra.mxu0 0
  %291 = vmatprep.subr.bf16.mxu0 0
  %292 = vmatpush1.bf16.msra.mxu0 0
  %293 = vmatprep.mubr.bf16.mxu0 0
  %294 = vmatmul.mubr.bf16.gmra.mrb[0].mxu0 %v259
  %v295 = vpop.f32.mrb[0].mxu0
  %v296 = vadd.f32 0.0, %v295
  %v297 = vpop.f32.mrb[0].mxu0
  %v298 = vpop.f32.mrb[0].mxu0
  %v299 = vpop.f32.mrb[0].mxu0
  %300 = vdwg.mxu0
  %v301 = vadd.f32 %v237, %v296
  %v302 = vxor.u32 %v301, 2147483648
  %v303 = vmul.f32 %v302, 1.442695
  %v304 = vpow.pop %v303
  %v305 = vadd.f32 %v304, 1.0
  %v306 = vrcp.pop %v305
  %v307 = vmul.f32 1.0, %v306
  %v308 = vtanh.pop %v301
  %v309 = vmul.f32 %v307, %v224
  %311 = vrot.lane.b32.xlu0 %v308, 64
  %v312 = vpop.permute.xlu0 %311
  %v314 = vmul.f32 %v307, %v312
  %316 = vrot.lane.b32.xlu0 %v314, 32
  %v317 = vpop.permute.xlu0 %316
  %v319 = vadd.f32 %v309, %v317
  %v320 = vtanh.pop %v319
  %322 = vrot.lane.b32.xlu0 %v320, 64
  %v323 = vpop.permute.xlu0 %322
  %v325 = vmul.f32 %v307, %v323
  %327 = vrot.lane.b32.xlu0 %v325, 32
  %v328 = vpop.permute.xlu0 %327
  %s330 = scalar_lea.vmem [#allocation3], 8
  %331 = vst.msk [vmem:[%s330] sm:$0xff] %vm162, %v328
  %s332 = scalar_lea.vmem [#allocation2], 16
  %v333 = vld [vmem:[%s332] sm:$0xff]
  %v334 = vpack.c.bf16 %v325, %v325
  %v335 = vld [vmem:[%s3] sm:$0xf]
  %v336 = vld [vmem:[%s3 + $0x4] sm:$0xf]
  %v337 = vld [vmem:[%s3 + $0x8] sm:$0xf]
  %v338 = vld [vmem:[%s3 + $0xc] sm:$0xf]
  %340 = vrot.lane.b32.xlu0 %v334, 32
  %v341 = vpop.permute.xlu0 %340
  %v346 = vunpack.c.l.b16 %v335
  %v347 = vunpack.c.l.b16 %v336
  %v348 = vunpack.c.l.b16 %v337
  %v349 = vunpack.c.l.b16 %v338
  %v350 = vpack.c.b16 %v347, %v346
  %v351 = vpack.c.b16 %v349, %v348
  %v355 = vsel %vm162, %v341, 0
  %357 = vmatprep.subr.bf16.mxu0 0
  %358 = vmatpush1.bf16.msra.mxu0 %v350
  %359 = vmatprep.subr.bf16.mxu0 0
  %360 = vmatpush1.bf16.msra.mxu0 %v351
  %361 = vmatprep.subr.bf16.mxu0 0
  %362 = vmatpush1.bf16.msra.mxu0 0
  %363 = vmatprep.subr.bf16.mxu0 0
  %364 = vmatpush1.bf16.msra.mxu0 0
  %365 = vmatprep.subr.bf16.mxu0 0
  %366 = vmatpush1.bf16.msra.mxu0 0
  %367 = vmatprep.subr.bf16.mxu0 0
  %368 = vmatpush1.bf16.msra.mxu0 0
  %369 = vmatprep.subr.bf16.mxu0 0
  %370 = vmatpush1.bf16.msra.mxu0 0
  %371 = vmatprep.subr.bf16.mxu0 0
  %372 = vmatpush1.bf16.msra.mxu0 0
  %373 = vmatprep.subr.bf16.mxu0 0
  %374 = vmatpush1.bf16.msra.mxu0 0
  %375 = vmatprep.subr.bf16.mxu0 0
  %376 = vmatpush1.bf16.msra.mxu0 0
  %377 = vmatprep.subr.bf16.mxu0 0
  %378 = vmatpush1.bf16.msra.mxu0 0
  %379 = vmatprep.subr.bf16.mxu0 0
  %380 = vmatpush1.bf16.msra.mxu0 0
  %381 = vmatprep.subr.bf16.mxu0 0
  %382 = vmatpush1.bf16.msra.mxu0 0
  %383 = vmatprep.subr.bf16.mxu0 0
  %384 = vmatpush1.bf16.msra.mxu0 0
  %385 = vmatprep.subr.bf16.mxu0 0
  %386 = vmatpush1.bf16.msra.mxu0 0
  %387 = vmatprep.subr.bf16.mxu0 0
  %388 = vmatpush1.bf16.msra.mxu0 0
  %389 = vmatprep.mubr.bf16.mxu0 0
  %390 = vmatmul.mubr.bf16.gmra.mrb[0].mxu0 %v355
  %v391 = vpop.f32.mrb[0].mxu0
  %v392 = vadd.f32 0.0, %v391
  %v393 = vpop.f32.mrb[0].mxu0
  %v394 = vpop.f32.mrb[0].mxu0
  %v395 = vpop.f32.mrb[0].mxu0
  %396 = vdwg.mxu0
  %v397 = vadd.f32 %v333, %v392
  %v398 = vxor.u32 %v397, 2147483648
  %v399 = vmul.f32 %v398, 1.442695
  %v400 = vpow.pop %v399
  %v401 = vadd.f32 %v400, 1.0
  %v402 = vrcp.pop %v401
  %v403 = vmul.f32 1.0, %v402
  %v404 = vtanh.pop %v397
  %v405 = vmul.f32 %v403, %v319
  %407 = vrot.lane.b32.xlu0 %v404, 64
  %v408 = vpop.permute.xlu0 %407
  %v410 = vmul.f32 %v403, %v408
  %412 = vrot.lane.b32.xlu0 %v410, 32
  %v413 = vpop.permute.xlu0 %412
  %v415 = vadd.f32 %v405, %v413
  %v416 = vtanh.pop %v415
  %418 = vrot.lane.b32.xlu0 %v416, 64
  %v419 = vpop.permute.xlu0 %418
  %v421 = vmul.f32 %v403, %v419
  %423 = vrot.lane.b32.xlu0 %v421, 32
  %v424 = vpop.permute.xlu0 %423
  %s426 = scalar_lea.vmem [#allocation3], 16
  %427 = vst.msk [vmem:[%s426] sm:$0xff] %vm162, %v424
  %s428 = scalar_lea.vmem [#allocation2], 24
  %v429 = vld [vmem:[%s428] sm:$0xff]
  %v430 = vpack.c.bf16 %v421, %v421
  %v431 = vld [vmem:[%s3] sm:$0xf]
  %v432 = vld [vmem:[%s3 + $0x4] sm:$0xf]
  %v433 = vld [vmem:[%s3 + $0x8] sm:$0xf]
  %v434 = vld [vmem:[%s3 + $0xc] sm:$0xf]
  %436 = vrot.lane.b32.xlu0 %v430, 32
  %v437 = vpop.permute.xlu0 %436
  %v442 = vunpack.c.l.b16 %v431
  %v443 = vunpack.c.l.b16 %v432
  %v444 = vunpack.c.l.b16 %v433
  %v445 = vunpack.c.l.b16 %v434
  %v446 = vpack.c.b16 %v443, %v442
  %v447 = vpack.c.b16 %v445, %v444
  %v451 = vsel %vm162, %v437, 0
  %453 = vmatprep.subr.bf16.mxu0 0
  %454 = vmatpush1.bf16.msra.mxu0 %v446
  %455 = vmatprep.subr.bf16.mxu0 0
  %456 = vmatpush1.bf16.msra.mxu0 %v447
  %457 = vmatprep.subr.bf16.mxu0 0
  %458 = vmatpush1.bf16.msra.mxu0 0
  %459 = vmatprep.subr.bf16.mxu0 0
  %460 = vmatpush1.bf16.msra.mxu0 0
  %461 = vmatprep.subr.bf16.mxu0 0
  %462 = vmatpush1.bf16.msra.mxu0 0
  %463 = vmatprep.subr.bf16.mxu0 0
  %464 = vmatpush1.bf16.msra.mxu0 0
  %465 = vmatprep.subr.bf16.mxu0 0
  %466 = vmatpush1.bf16.msra.mxu0 0
  %467 = vmatprep.subr.bf16.mxu0 0
  %468 = vmatpush1.bf16.msra.mxu0 0
  %469 = vmatprep.subr.bf16.mxu0 0
  %470 = vmatpush1.bf16.msra.mxu0 0
  %471 = vmatprep.subr.bf16.mxu0 0
  %472 = vmatpush1.bf16.msra.mxu0 0
  %473 = vmatprep.subr.bf16.mxu0 0
  %474 = vmatpush1.bf16.msra.mxu0 0
  %475 = vmatprep.subr.bf16.mxu0 0
  %476 = vmatpush1.bf16.msra.mxu0 0
  %477 = vmatprep.subr.bf16.mxu0 0
  %478 = vmatpush1.bf16.msra.mxu0 0
  %479 = vmatprep.subr.bf16.mxu0 0
  %480 = vmatpush1.bf16.msra.mxu0 0
  %481 = vmatprep.subr.bf16.mxu0 0
  %482 = vmatpush1.bf16.msra.mxu0 0
  %483 = vmatprep.subr.bf16.mxu0 0
  %484 = vmatpush1.bf16.msra.mxu0 0
  %485 = vmatprep.mubr.bf16.mxu0 0
  %486 = vmatmul.mubr.bf16.gmra.mrb[0].mxu0 %v451
  %v487 = vpop.f32.mrb[0].mxu0
  %v488 = vadd.f32 0.0, %v487
  %v489 = vpop.f32.mrb[0].mxu0
  %v490 = vpop.f32.mrb[0].mxu0
  %v491 = vpop.f32.mrb[0].mxu0
  %492 = vdwg.mxu0
  %v493 = vadd.f32 %v429, %v488
  %v494 = vxor.u32 %v493, 2147483648
  %v495 = vmul.f32 %v494, 1.442695
  %v496 = vpow.pop %v495
  %v497 = vadd.f32 %v496, 1.0
  %v498 = vrcp.pop %v497
  %v499 = vmul.f32 1.0, %v498
  %v500 = vtanh.pop %v493
  %v501 = vmul.f32 %v499, %v415
  %503 = vrot.lane.b32.xlu0 %v500, 64
  %v504 = vpop.permute.xlu0 %503
  %v506 = vmul.f32 %v499, %v504
  %508 = vrot.lane.b32.xlu0 %v506, 32
  %v509 = vpop.permute.xlu0 %508
  %v511 = vadd.f32 %v501, %v509
  %v512 = vtanh.pop %v511
  %514 = vrot.lane.b32.xlu0 %v512, 64
  %v515 = vpop.permute.xlu0 %514
  %v517 = vmul.f32 %v499, %v515
  %519 = vrot.lane.b32.xlu0 %v517, 32
  %v520 = vpop.permute.xlu0 %519
  %s522 = scalar_lea.vmem [#allocation3], 24
  %523 = vst.msk [vmem:[%s522] sm:$0xff] %vm162, %v520
  %s524 = scalar_lea.vmem [#allocation2], 32
  %v525 = vld [vmem:[%s524] sm:$0xff]
  %v526 = vpack.c.bf16 %v517, %v517
  %v527 = vld [vmem:[%s3] sm:$0xf]
  %v528 = vld [vmem:[%s3 + $0x4] sm:$0xf]
  %v529 = vld [vmem:[%s3 + $0x8] sm:$0xf]
  %v530 = vld [vmem:[%s3 + $0xc] sm:$0xf]
  %532 = vrot.lane.b32.xlu0 %v526, 32
  %v533 = vpop.permute.xlu0 %532
  %v538 = vunpack.c.l.b16 %v527
  %v539 = vunpack.c.l.b16 %v528
  %v540 = vunpack.c.l.b16 %v529
  %v541 = vunpack.c.l.b16 %v530
  %v542 = vpack.c.b16 %v539, %v538
  %v543 = vpack.c.b16 %v541, %v540
  %v547 = vsel %vm162, %v533, 0
  %549 = vmatprep.subr.bf16.mxu0 0
  %550 = vmatpush1.bf16.msra.mxu0 %v542
  %551 = vmatprep.subr.bf16.mxu0 0
  %552 = vmatpush1.bf16.msra.mxu0 %v543
  %553 = vmatprep.subr.bf16.mxu0 0
  %554 = vmatpush1.bf16.msra.mxu0 0
  %555 = vmatprep.subr.bf16.mxu0 0
  %556 = vmatpush1.bf16.msra.mxu0 0
  %557 = vmatprep.subr.bf16.mxu0 0
  %558 = vmatpush1.bf16.msra.mxu0 0
  %559 = vmatprep.subr.bf16.mxu0 0
  %560 = vmatpush1.bf16.msra.mxu0 0
  %561 = vmatprep.subr.bf16.mxu0 0
  %562 = vmatpush1.bf16.msra.mxu0 0
  %563 = vmatprep.subr.bf16.mxu0 0
  %564 = vmatpush1.bf16.msra.mxu0 0
  %565 = vmatprep.subr.bf16.mxu0 0
  %566 = vmatpush1.bf16.msra.mxu0 0
  %567 = vmatprep.subr.bf16.mxu0 0
  %568 = vmatpush1.bf16.msra.mxu0 0
  %569 = vmatprep.subr.bf16.mxu0 0
  %570 = vmatpush1.bf16.msra.mxu0 0
  %571 = vmatprep.subr.bf16.mxu0 0
  %572 = vmatpush1.bf16.msra.mxu0 0
  %573 = vmatprep.subr.bf16.mxu0 0
  %574 = vmatpush1.bf16.msra.mxu0 0
  %575 = vmatprep.subr.bf16.mxu0 0
  %576 = vmatpush1.bf16.msra.mxu0 0
  %577 = vmatprep.subr.bf16.mxu0 0
  %578 = vmatpush1.bf16.msra.mxu0 0
  %579 = vmatprep.subr.bf16.mxu0 0
  %580 = vmatpush1.bf16.msra.mxu0 0
  %581 = vmatprep.mubr.bf16.mxu0 0
  %582 = vmatmul.mubr.bf16.gmra.mrb[0].mxu0 %v547
  %v583 = vpop.f32.mrb[0].mxu0
  %v584 = vadd.f32 0.0, %v583
  %v585 = vpop.f32.mrb[0].mxu0
  %v586 = vpop.f32.mrb[0].mxu0
  %v587 = vpop.f32.mrb[0].mxu0
  %588 = vdwg.mxu0
  %v589 = vadd.f32 %v525, %v584
  %v590 = vxor.u32 %v589, 2147483648
  %v591 = vmul.f32 %v590, 1.442695
  %v592 = vpow.pop %v591
  %v593 = vadd.f32 %v592, 1.0
  %v594 = vrcp.pop %v593
  %v595 = vmul.f32 1.0, %v594
  %v596 = vtanh.pop %v589
  %v597 = vmul.f32 %v595, %v511
  %599 = vrot.lane.b32.xlu0 %v596, 64
  %v600 = vpop.permute.xlu0 %599
  %v602 = vmul.f32 %v595, %v600
  %604 = vrot.lane.b32.xlu0 %v602, 32
  %v605 = vpop.permute.xlu0 %604
  %v607 = vadd.f32 %v597, %v605
  %v608 = vtanh.pop %v607
  %610 = vrot.lane.b32.xlu0 %v608, 64
  %v611 = vpop.permute.xlu0 %610
  %v613 = vmul.f32 %v595, %v611
  %615 = vrot.lane.b32.xlu0 %v613, 32
  %v616 = vpop.permute.xlu0 %615
  %s618 = scalar_lea.vmem [#allocation3], 32
  %619 = vst.msk [vmem:[%s618] sm:$0xff] %vm162, %v616
  %s620 = scalar_lea.vmem [#allocation2], 40
  %v621 = vld [vmem:[%s620] sm:$0xff]
  %v622 = vpack.c.bf16 %v613, %v613
  %v623 = vld [vmem:[%s3] sm:$0xf]
  %v624 = vld [vmem:[%s3 + $0x4] sm:$0xf]
  %v625 = vld [vmem:[%s3 + $0x8] sm:$0xf]
  %v626 = vld [vmem:[%s3 + $0xc] sm:$0xf]
  %628 = vrot.lane.b32.xlu0 %v622, 32
  %v629 = vpop.permute.xlu0 %628
  %v634 = vunpack.c.l.b16 %v623
  %v635 = vunpack.c.l.b16 %v624
  %v636 = vunpack.c.l.b16 %v625
  %v637 = vunpack.c.l.b16 %v626
  %v638 = vpack.c.b16 %v635, %v634
  %v639 = vpack.c.b16 %v637, %v636
  %v643 = vsel %vm162, %v629, 0
  %645 = vmatprep.subr.bf16.mxu0 0
  %646 = vmatpush1.bf16.msra.mxu0 %v638
  %647 = vmatprep.subr.bf16.mxu0 0
  %648 = vmatpush1.bf16.msra.mxu0 %v639
  %649 = vmatprep.subr.bf16.mxu0 0
  %650 = vmatpush1.bf16.msra.mxu0 0
  %651 = vmatprep.subr.bf16.mxu0 0
  %652 = vmatpush1.bf16.msra.mxu0 0
  %653 = vmatprep.subr.bf16.mxu0 0
  %654 = vmatpush1.bf16.msra.mxu0 0
  %655 = vmatprep.subr.bf16.mxu0 0
  %656 = vmatpush1.bf16.msra.mxu0 0
  %657 = vmatprep.subr.bf16.mxu0 0
  %658 = vmatpush1.bf16.msra.mxu0 0
  %659 = vmatprep.subr.bf16.mxu0 0
  %660 = vmatpush1.bf16.msra.mxu0 0
  %661 = vmatprep.subr.bf16.mxu0 0
  %662 = vmatpush1.bf16.msra.mxu0 0
  %663 = vmatprep.subr.bf16.mxu0 0
  %664 = vmatpush1.bf16.msra.mxu0 0
  %665 = vmatprep.subr.bf16.mxu0 0
  %666 = vmatpush1.bf16.msra.mxu0 0
  %667 = vmatprep.subr.bf16.mxu0 0
  %668 = vmatpush1.bf16.msra.mxu0 0
  %669 = vmatprep.subr.bf16.mxu0 0
  %670 = vmatpush1.bf16.msra.mxu0 0
  %671 = vmatprep.subr.bf16.mxu0 0
  %672 = vmatpush1.bf16.msra.mxu0 0
  %673 = vmatprep.subr.bf16.mxu0 0
  %674 = vmatpush1.bf16.msra.mxu0 0
  %675 = vmatprep.subr.bf16.mxu0 0
  %676 = vmatpush1.bf16.msra.mxu0 0
  %677 = vmatprep.mubr.bf16.mxu0 0
  %678 = vmatmul.mubr.bf16.gmra.mrb[0].mxu0 %v643
  %v679 = vpop.f32.mrb[0].mxu0
  %v680 = vadd.f32 0.0, %v679
  %v681 = vpop.f32.mrb[0].mxu0
  %v682 = vpop.f32.mrb[0].mxu0
  %v683 = vpop.f32.mrb[0].mxu0
  %684 = vdwg.mxu0
  %v685 = vadd.f32 %v621, %v680
  %v686 = vxor.u32 %v685, 2147483648
  %v687 = vmul.f32 %v686, 1.442695
  %v688 = vpow.pop %v687
  %v689 = vadd.f32 %v688, 1.0
  %v690 = vrcp.pop %v689
  %v691 = vmul.f32 1.0, %v690
  %v692 = vtanh.pop %v685
  %v693 = vmul.f32 %v691, %v607
  %695 = vrot.lane.b32.xlu0 %v692, 64
  %v696 = vpop.permute.xlu0 %695
  %v698 = vmul.f32 %v691, %v696
  %700 = vrot.lane.b32.xlu0 %v698, 32
  %v701 = vpop.permute.xlu0 %700
  %v703 = vadd.f32 %v693, %v701
  %v704 = vtanh.pop %v703
  %706 = vrot.lane.b32.xlu0 %v704, 64
  %v707 = vpop.permute.xlu0 %706
  %v709 = vmul.f32 %v691, %v707
  %711 = vrot.lane.b32.xlu0 %v709, 32
  %v712 = vpop.permute.xlu0 %711
  %s714 = scalar_lea.vmem [#allocation3], 40
  %715 = vst.msk [vmem:[%s714] sm:$0xff] %vm162, %v712
  %s716 = scalar_lea.vmem [#allocation2], 48
  %v717 = vld [vmem:[%s716] sm:$0xff]
  %v718 = vpack.c.bf16 %v709, %v709
  %v719 = vld [vmem:[%s3] sm:$0xf]
  %v720 = vld [vmem:[%s3 + $0x4] sm:$0xf]
  %v721 = vld [vmem:[%s3 + $0x8] sm:$0xf]
  %v722 = vld [vmem:[%s3 + $0xc] sm:$0xf]
  %724 = vrot.lane.b32.xlu0 %v718, 32
  %v725 = vpop.permute.xlu0 %724
  %v730 = vunpack.c.l.b16 %v719
  %v731 = vunpack.c.l.b16 %v720
  %v732 = vunpack.c.l.b16 %v721
  %v733 = vunpack.c.l.b16 %v722
  %v734 = vpack.c.b16 %v731, %v730
  %v735 = vpack.c.b16 %v733, %v732
  %v739 = vsel %vm162, %v725, 0
  %741 = vmatprep.subr.bf16.mxu0 0
  %742 = vmatpush1.bf16.msra.mxu0 %v734
  %743 = vmatprep.subr.bf16.mxu0 0
  %744 = vmatpush1.bf16.msra.mxu0 %v735
  %745 = vmatprep.subr.bf16.mxu0 0
  %746 = vmatpush1.bf16.msra.mxu0 0
  %747 = vmatprep.subr.bf16.mxu0 0
  %748 = vmatpush1.bf16.msra.mxu0 0
  %749 = vmatprep.subr.bf16.mxu0 0
  %750 = vmatpush1.bf16.msra.mxu0 0
  %751 = vmatprep.subr.bf16.mxu0 0
  %752 = vmatpush1.bf16.msra.mxu0 0
  %753 = vmatprep.subr.bf16.mxu0 0
  %754 = vmatpush1.bf16.msra.mxu0 0
  %755 = vmatprep.subr.bf16.mxu0 0
  %756 = vmatpush1.bf16.msra.mxu0 0
  %757 = vmatprep.subr.bf16.mxu0 0
  %758 = vmatpush1.bf16.msra.mxu0 0
  %759 = vmatprep.subr.bf16.mxu0 0
  %760 = vmatpush1.bf16.msra.mxu0 0
  %761 = vmatprep.subr.bf16.mxu0 0
  %762 = vmatpush1.bf16.msra.mxu0 0
  %763 = vmatprep.subr.bf16.mxu0 0
  %764 = vmatpush1.bf16.msra.mxu0 0
  %765 = vmatprep.subr.bf16.mxu0 0
  %766 = vmatpush1.bf16.msra.mxu0 0
  %767 = vmatprep.subr.bf16.mxu0 0
  %768 = vmatpush1.bf16.msra.mxu0 0
  %769 = vmatprep.subr.bf16.mxu0 0
  %770 = vmatpush1.bf16.msra.mxu0 0
  %771 = vmatprep.subr.bf16.mxu0 0
  %772 = vmatpush1.bf16.msra.mxu0 0
  %773 = vmatprep.mubr.bf16.mxu0 0
  %774 = vmatmul.mubr.bf16.gmra.mrb[0].mxu0 %v739
  %v775 = vpop.f32.mrb[0].mxu0
  %v776 = vadd.f32 0.0, %v775
  %v777 = vpop.f32.mrb[0].mxu0
  %v778 = vpop.f32.mrb[0].mxu0
  %v779 = vpop.f32.mrb[0].mxu0
  %780 = vdwg.mxu0
  %v781 = vadd.f32 %v717, %v776
  %v782 = vxor.u32 %v781, 2147483648
  %v783 = vmul.f32 %v782, 1.442695
  %v784 = vpow.pop %v783
  %v785 = vadd.f32 %v784, 1.0
  %v786 = vrcp.pop %v785
  %v787 = vmul.f32 1.0, %v786
  %v788 = vtanh.pop %v781
  %v789 = vmul.f32 %v787, %v703
  %791 = vrot.lane.b32.xlu0 %v788, 64
  %v792 = vpop.permute.xlu0 %791
  %v794 = vmul.f32 %v787, %v792
  %796 = vrot.lane.b32.xlu0 %v794, 32
  %v797 = vpop.permute.xlu0 %796
  %v799 = vadd.f32 %v789, %v797
  %v800 = vtanh.pop %v799
  %802 = vrot.lane.b32.xlu0 %v800, 64
  %v803 = vpop.permute.xlu0 %802
  %v805 = vmul.f32 %v787, %v803
  %807 = vrot.lane.b32.xlu0 %v805, 32
  %v808 = vpop.permute.xlu0 %807
  %s810 = scalar_lea.vmem [#allocation3], 48
  %811 = vst.msk [vmem:[%s810] sm:$0xff] %vm162, %v808
  %s812 = scalar_lea.vmem [#allocation2], 56
  %v813 = vld [vmem:[%s812] sm:$0xff]
  %v814 = vpack.c.bf16 %v805, %v805
  %v815 = vld [vmem:[%s3] sm:$0xf]
  %v816 = vld [vmem:[%s3 + $0x4] sm:$0xf]
  %v817 = vld [vmem:[%s3 + $0x8] sm:$0xf]
  %v818 = vld [vmem:[%s3 + $0xc] sm:$0xf]
  %820 = vrot.lane.b32.xlu0 %v814, 32
  %v821 = vpop.permute.xlu0 %820
  %v826 = vunpack.c.l.b16 %v815
  %v827 = vunpack.c.l.b16 %v816
  %v828 = vunpack.c.l.b16 %v817
  %v829 = vunpack.c.l.b16 %v818
  %v830 = vpack.c.b16 %v827, %v826
  %v831 = vpack.c.b16 %v829, %v828
  %v835 = vsel %vm162, %v821, 0
  %837 = vmatprep.subr.bf16.mxu0 0
  %838 = vmatpush1.bf16.msra.mxu0 %v830
  %839 = vmatprep.subr.bf16.mxu0 0
  %840 = vmatpush1.bf16.msra.mxu0 %v831
  %841 = vmatprep.subr.bf16.mxu0 0
  %842 = vmatpush1.bf16.msra.mxu0 0
  %843 = vmatprep.subr.bf16.mxu0 0
  %844 = vmatpush1.bf16.msra.mxu0 0
  %845 = vmatprep.subr.bf16.mxu0 0
  %846 = vmatpush1.bf16.msra.mxu0 0
  %847 = vmatprep.subr.bf16.mxu0 0
  %848 = vmatpush1.bf16.msra.mxu0 0
  %849 = vmatprep.subr.bf16.mxu0 0
  %850 = vmatpush1.bf16.msra.mxu0 0
  %851 = vmatprep.subr.bf16.mxu0 0
  %852 = vmatpush1.bf16.msra.mxu0 0
  %853 = vmatprep.subr.bf16.mxu0 0
  %854 = vmatpush1.bf16.msra.mxu0 0
  %855 = vmatprep.subr.bf16.mxu0 0
  %856 = vmatpush1.bf16.msra.mxu0 0
  %857 = vmatprep.subr.bf16.mxu0 0
  %858 = vmatpush1.bf16.msra.mxu0 0
  %859 = vmatprep.subr.bf16.mxu0 0
  %860 = vmatpush1.bf16.msra.mxu0 0
  %861 = vmatprep.subr.bf16.mxu0 0
  %862 = vmatpush1.bf16.msra.mxu0 0
  %863 = vmatprep.subr.bf16.mxu0 0
  %864 = vmatpush1.bf16.msra.mxu0 0
  %865 = vmatprep.subr.bf16.mxu0 0
  %866 = vmatpush1.bf16.msra.mxu0 0
  %867 = vmatprep.subr.bf16.mxu0 0
  %868 = vmatpush1.bf16.msra.mxu0 0
  %869 = vmatprep.mubr.bf16.mxu0 0
  %870 = vmatmul.mubr.bf16.gmra.mrb[0].mxu0 %v835
  %v871 = vpop.f32.mrb[0].mxu0
  %v872 = vadd.f32 0.0, %v871
  %v873 = vpop.f32.mrb[0].mxu0
  %v874 = vpop.f32.mrb[0].mxu0
  %v875 = vpop.f32.mrb[0].mxu0
  %876 = vdwg.mxu0
  %v877 = vadd.f32 %v813, %v872
  %v878 = vxor.u32 %v877, 2147483648
  %v879 = vmul.f32 %v878, 1.442695
  %v880 = vpow.pop %v879
  %v881 = vadd.f32 %v880, 1.0
  %v882 = vrcp.pop %v881
  %v883 = vmul.f32 1.0, %v882
  %v884 = vtanh.pop %v877
  %v885 = vmul.f32 %v883, %v799
  %887 = vrot.lane.b32.xlu0 %v884, 64
  %v888 = vpop.permute.xlu0 %887
  %v890 = vmul.f32 %v883, %v888
  %892 = vrot.lane.b32.xlu0 %v890, 32
  %v893 = vpop.permute.xlu0 %892
  %v895 = vadd.f32 %v885, %v893
  %v896 = vtanh.pop %v895
  %898 = vrot.lane.b32.xlu0 %v896, 64
  %v899 = vpop.permute.xlu0 %898
  %v901 = vmul.f32 %v883, %v899
  %903 = vrot.lane.b32.xlu0 %v901, 32
  %v904 = vpop.permute.xlu0 %903
  %s906 = scalar_lea.vmem [#allocation3], 56
  %907 = vst.msk [vmem:[%s906] sm:$0xff] %vm162, %v904
  %v908 = vld [vmem:[#allocation3] sm:$0xff]
  %v909 = vld [vmem:[#allocation3 + $0x8] sm:$0xff]
  %v910 = vld [vmem:[#allocation3 + $0x10] sm:$0xff]
  %v911 = vld [vmem:[#allocation3 + $0x18] sm:$0xff]
  %v912 = vld [vmem:[#allocation3 + $0x20] sm:$0xff]
  %v913 = vld [vmem:[#allocation3 + $0x28] sm:$0xff]
  %v914 = vld [vmem:[#allocation3 + $0x30] sm:$0xff]
  %v915 = vld [vmem:[#allocation3 + $0x38] sm:$0xff]
  %v916 = vpack.c.bf16 %v909, %v908
  %v917 = vpack.c.bf16 %v911, %v910
  %v918 = vpack.c.bf16 %v913, %v912
  %v919 = vpack.c.bf16 %v915, %v914
  %v920 = vld [vmem:[%s2] sm:$0xf]
  %v921 = vld [vmem:[%s2 + $0x4] sm:$0xf]
  %v922 = vld [vmem:[%s2 + $0x8] sm:$0xf]
  %v923 = vld [vmem:[%s2 + $0xc] sm:$0xf]
  %v924 = vld [vmem:[%s6] sm:$0x1]
  %v926 = vlaneseq
  %v927 = vshrl.u32 %v926, 7
  %v928 = vsub.s32 0, %v927
  %v929 = vrot.slane %v924, %v928
  %v935 = vunpack.c.l.b16 %v920
  %v936 = vunpack.c.l.b16 %v921
  %v937 = vunpack.c.l.b16 %v922
  %v938 = vunpack.c.l.b16 %v923
  %v939 = vpack.c.b16 %v936, %v935
  %v940 = vpack.c.b16 %v938, %v937
  %v944 = vsel %vm162, %v916, 0
  %v947 = vsel %vm162, %v917, 0
  %v950 = vsel %vm162, %v918, 0
  %v953 = vsel %vm162, %v919, 0
  %955 = vmatprep.subr.bf16.mxu0 0
  %956 = vmatpush1.bf16.msra.mxu0 %v939
  %957 = vmatprep.subr.bf16.mxu0 0
  %958 = vmatpush1.bf16.msra.mxu0 %v940
  %959 = vmatprep.subr.bf16.mxu0 0
  %960 = vmatpush1.bf16.msra.mxu0 0
  %961 = vmatprep.subr.bf16.mxu0 0
  %962 = vmatpush1.bf16.msra.mxu0 0
  %963 = vmatprep.subr.bf16.mxu0 0
  %964 = vmatpush1.bf16.msra.mxu0 0
  %965 = vmatprep.subr.bf16.mxu0 0
  %966 = vmatpush1.bf16.msra.mxu0 0
  %967 = vmatprep.subr.bf16.mxu0 0
  %968 = vmatpush1.bf16.msra.mxu0 0
  %969 = vmatprep.subr.bf16.mxu0 0
  %970 = vmatpush1.bf16.msra.mxu0 0
  %971 = vmatprep.subr.bf16.mxu0 0
  %972 = vmatpush1.bf16.msra.mxu0 0
  %973 = vmatprep.subr.bf16.mxu0 0
  %974 = vmatpush1.bf16.msra.mxu0 0
  %975 = vmatprep.subr.bf16.mxu0 0
  %976 = vmatpush1.bf16.msra.mxu0 0
  %977 = vmatprep.subr.bf16.mxu0 0
  %978 = vmatpush1.bf16.msra.mxu0 0
  %979 = vmatprep.subr.bf16.mxu0 0
  %980 = vmatpush1.bf16.msra.mxu0 0
  %981 = vmatprep.subr.bf16.mxu0 0
  %982 = vmatpush1.bf16.msra.mxu0 0
  %983 = vmatprep.subr.bf16.mxu0 0
  %984 = vmatpush1.bf16.msra.mxu0 0
  %985 = vmatprep.subr.bf16.mxu0 0
  %986 = vmatpush1.bf16.msra.mxu0 0
  %987 = vmatprep.mubr.bf16.mxu0 0
  %988 = vmatmul.mubr.bf16.gmra.mrb[0].mxu0 %v944
  %v989 = vpop.f32.mrb[0].mxu0
  %v990 = vadd.f32 %v929, %v989
  %v991 = vpop.f32.mrb[0].mxu0
  %v992 = vpop.f32.mrb[0].mxu0
  %v993 = vadd.f32 %v929, %v992
  %v994 = vpop.f32.mrb[0].mxu0
  %995 = vmatprep.mubr.bf16.mxu0 0
  %996 = vmatmul.mubr.bf16.gmra.mrb[0].mxu0 %v947
  %v997 = vpop.f32.mrb[0].mxu0
  %v998 = vadd.f32 %v929, %v997
  %v999 = vpop.f32.mrb[0].mxu0
  %v1000 = vpop.f32.mrb[0].mxu0
  %v1001 = vadd.f32 %v929, %v1000
  %v1002 = vpop.f32.mrb[0].mxu0
  %1003 = vmatprep.mubr.bf16.mxu0 0
  %1004 = vmatmul.mubr.bf16.gmra.mrb[0].mxu0 %v950
  %v1005 = vpop.f32.mrb[0].mxu0
  %v1006 = vadd.f32 %v929, %v1005
  %v1007 = vpop.f32.mrb[0].mxu0
  %v1008 = vpop.f32.mrb[0].mxu0
  %v1009 = vadd.f32 %v929, %v1008
  %v1010 = vpop.f32.mrb[0].mxu0
  %1011 = vmatprep.mubr.bf16.mxu0 0
  %1012 = vmatmul.mubr.bf16.gmra.mrb[0].mxu0 %v953
  %v1013 = vpop.f32.mrb[0].mxu0
  %v1014 = vadd.f32 %v929, %v1013
  %v1015 = vpop.f32.mrb[0].mxu0
  %v1016 = vpop.f32.mrb[0].mxu0
  %v1017 = vadd.f32 %v929, %v1016
  %v1018 = vpop.f32.mrb[0].mxu0
  %1019 = vdwg.mxu0
  %1020 = vst [vmem:[#allocation2] sm:$0xff] %v990
  %1021 = vst [vmem:[#allocation2 + $0x8] sm:$0xff] %v993
  %1022 = vst [vmem:[#allocation2 + $0x10] sm:$0xff] %v998
  %1023 = vst [vmem:[#allocation2 + $0x18] sm:$0xff] %v1001
  %1024 = vst [vmem:[#allocation2 + $0x20] sm:$0xff] %v1006
  %1025 = vst [vmem:[#allocation2 + $0x28] sm:$0xff] %v1009
  %1026 = vst [vmem:[#allocation2 + $0x30] sm:$0xff] %v1014
  %1027 = vst [vmem:[#allocation2 + $0x38] sm:$0xff] %v1017
  %v1028 = vld [vmem:[#allocation2] sm:$0xff]
  %v1029 = vld [vmem:[%s4] sm:$0xf]
  %v1030 = vld [vmem:[%s4 + $0x4] sm:$0xf]
  %v1031 = vld [vmem:[%s4 + $0x8] sm:$0xf]
  %v1032 = vld [vmem:[%s4 + $0xc] sm:$0xf]
  %v1037 = vunpack.c.l.b16 %v1029
  %v1038 = vunpack.c.l.b16 %v1030
  %v1039 = vunpack.c.l.b16 %v1031
  %v1040 = vunpack.c.l.b16 %v1032
  %v1041 = vpack.c.b16 %v1038, %v1037
  %v1042 = vpack.c.b16 %v1040, %v1039
  %1045 = vmatprep.subr.bf16.mxu0 0
  %1046 = vmatpush1.bf16.msra.mxu0 %v1041
  %1047 = vmatprep.subr.bf16.mxu0 0
  %1048 = vmatpush1.bf16.msra.mxu0 %v1042
  %1049 = vmatprep.subr.bf16.mxu0 0
  %1050 = vmatpush1.bf16.msra.mxu0 0
  %1051 = vmatprep.subr.bf16.mxu0 0
  %1052 = vmatpush1.bf16.msra.mxu0 0
  %1053 = vmatprep.subr.bf16.mxu0 0
  %1054 = vmatpush1.bf16.msra.mxu0 0
  %1055 = vmatprep.subr.bf16.mxu0 0
  %1056 = vmatpush1.bf16.msra.mxu0 0
  %1057 = vmatprep.subr.bf16.mxu0 0
  %1058 = vmatpush1.bf16.msra.mxu0 0
  %1059 = vmatprep.subr.bf16.mxu0 0
  %1060 = vmatpush1.bf16.msra.mxu0 0
  %1061 = vmatprep.subr.bf16.mxu0 0
  %1062 = vmatpush1.bf16.msra.mxu0 0
  %1063 = vmatprep.subr.bf16.mxu0 0
  %1064 = vmatpush1.bf16.msra.mxu0 0
  %1065 = vmatprep.subr.bf16.mxu0 0
  %1066 = vmatpush1.bf16.msra.mxu0 0
  %1067 = vmatprep.subr.bf16.mxu0 0
  %1068 = vmatpush1.bf16.msra.mxu0 0
  %1069 = vmatprep.subr.bf16.mxu0 0
  %1070 = vmatpush1.bf16.msra.mxu0 0
  %1071 = vmatprep.subr.bf16.mxu0 0
  %1072 = vmatpush1.bf16.msra.mxu0 0
  %1073 = vmatprep.subr.bf16.mxu0 0
  %1074 = vmatpush1.bf16.msra.mxu0 0
  %1075 = vmatprep.subr.bf16.mxu0 0
  %1076 = vmatpush1.bf16.msra.mxu0 0
  %1077 = vmatprep.mubr.bf16.mxu0 0
  %1078 = vmatmul.mubr.bf16.gmra.mrb[0].mxu0 %v164
  %v1079 = vpop.f32.mrb[0].mxu0
  %v1080 = vadd.f32 0.0, %v1079
  %v1081 = vpop.f32.mrb[0].mxu0
  %v1082 = vpop.f32.mrb[0].mxu0
  %v1083 = vpop.f32.mrb[0].mxu0
  %1084 = vdwg.mxu0
  %v1085 = vadd.f32 %v1028, %v1080
  %v1086 = vxor.u32 %v1085, 2147483648
  %v1087 = vmul.f32 %v1086, 1.442695
  %v1088 = vpow.pop %v1087
  %v1089 = vadd.f32 %v1088, 1.0
  %v1090 = vrcp.pop %v1089
  %v1091 = vmul.f32 1.0, %v1090
  %v1092 = vtanh.pop %v1085
  %v1093 = vmul.f32 %v1091, 0.0
  %1095 = vrot.lane.b32.xlu0 %v1092, 64
  %v1096 = vpop.permute.xlu0 %1095
  %v1098 = vmul.f32 %v1091, %v1096
  %1100 = vrot.lane.b32.xlu0 %v1098, 32
  %v1101 = vpop.permute.xlu0 %1100
  %v1103 = vadd.f32 %v1093, %v1101
  %v1104 = vtanh.pop %v1103
  %1106 = vrot.lane.b32.xlu0 %v1104, 64
  %v1107 = vpop.permute.xlu0 %1106
  %v1109 = vmul.f32 %v1091, %v1107
  %v1110 = vld [vmem:[%s236] sm:$0xff]
  %v1111 = vpack.c.bf16 %v1109, %v1109
  %1113 = vrot.lane.b32.xlu0 %v1111, 32
  %v1114 = vpop.permute.xlu0 %1113
  %v1116 = vsel %vm162, %v1114, 0
  %1118 = vmatprep.subr.bf16.mxu0 0
  %1119 = vmatpush1.bf16.msra.mxu0 %v1041
  %1120 = vmatprep.subr.bf16.mxu0 0
  %1121 = vmatpush1.bf16.msra.mxu0 %v1042
  %1122 = vmatprep.subr.bf16.mxu0 0
  %1123 = vmatpush1.bf16.msra.mxu0 0
  %1124 = vmatprep.subr.bf16.mxu0 0
  %1125 = vmatpush1.bf16.msra.mxu0 0
  %1126 = vmatprep.subr.bf16.mxu0 0
  %1127 = vmatpush1.bf16.msra.mxu0 0
  %1128 = vmatprep.subr.bf16.mxu0 0
  %1129 = vmatpush1.bf16.msra.mxu0 0
  %1130 = vmatprep.subr.bf16.mxu0 0
  %1131 = vmatpush1.bf16.msra.mxu0 0
  %1132 = vmatprep.subr.bf16.mxu0 0
  %1133 = vmatpush1.bf16.msra.mxu0 0
  %1134 = vmatprep.subr.bf16.mxu0 0
  %1135 = vmatpush1.bf16.msra.mxu0 0
  %1136 = vmatprep.subr.bf16.mxu0 0
  %1137 = vmatpush1.bf16.msra.mxu0 0
  %1138 = vmatprep.subr.bf16.mxu0 0
  %1139 = vmatpush1.bf16.msra.mxu0 0
  %1140 = vmatprep.subr.bf16.mxu0 0
  %1141 = vmatpush1.bf16.msra.mxu0 0
  %1142 = vmatprep.subr.bf16.mxu0 0
  %1143 = vmatpush1.bf16.msra.mxu0 0
  %1144 = vmatprep.subr.bf16.mxu0 0
  %1145 = vmatpush1.bf16.msra.mxu0 0
  %1146 = vmatprep.subr.bf16.mxu0 0
  %1147 = vmatpush1.bf16.msra.mxu0 0
  %1148 = vmatprep.subr.bf16.mxu0 0
  %1149 = vmatpush1.bf16.msra.mxu0 0
  %1150 = vmatprep.mubr.bf16.mxu0 0
  %1151 = vmatmul.mubr.bf16.gmra.mrb[0].mxu0 %v1116
  %v1152 = vpop.f32.mrb[0].mxu0
  %v1153 = vadd.f32 0.0, %v1152
  %v1154 = vpop.f32.mrb[0].mxu0
  %v1155 = vpop.f32.mrb[0].mxu0
  %v1156 = vpop.f32.mrb[0].mxu0
  %1157 = vdwg.mxu0
  %v1158 = vadd.f32 %v1110, %v1153
  %v1159 = vxor.u32 %v1158, 2147483648
  %v1160 = vmul.f32 %v1159, 1.442695
  %v1161 = vpow.pop %v1160
  %v1162 = vadd.f32 %v1161, 1.0
  %v1163 = vrcp.pop %v1162
  %v1164 = vmul.f32 1.0, %v1163
  %v1165 = vtanh.pop %v1158
  %v1166 = vmul.f32 %v1164, %v1103
  %1168 = vrot.lane.b32.xlu0 %v1165, 64
  %v1169 = vpop.permute.xlu0 %1168
  %v1171 = vmul.f32 %v1164, %v1169
  %1173 = vrot.lane.b32.xlu0 %v1171, 32
  %v1174 = vpop.permute.xlu0 %1173
  %v1176 = vadd.f32 %v1166, %v1174
  %v1177 = vtanh.pop %v1176
  %1179 = vrot.lane.b32.xlu0 %v1177, 64
  %v1180 = vpop.permute.xlu0 %1179
  %v1182 = vmul.f32 %v1164, %v1180
  %v1183 = vld [vmem:[%s332] sm:$0xff]
  %v1184 = vpack.c.bf16 %v1182, %v1182
  %1186 = vrot.lane.b32.xlu0 %v1184, 32
  %v1187 = vpop.permute.xlu0 %1186
  %v1189 = vsel %vm162, %v1187, 0
  %1191 = vmatprep.subr.bf16.mxu0 0
  %1192 = vmatpush1.bf16.msra.mxu0 %v1041
  %1193 = vmatprep.subr.bf16.mxu0 0
  %1194 = vmatpush1.bf16.msra.mxu0 %v1042
  %1195 = vmatprep.subr.bf16.mxu0 0
  %1196 = vmatpush1.bf16.msra.mxu0 0
  %1197 = vmatprep.subr.bf16.mxu0 0
  %1198 = vmatpush1.bf16.msra.mxu0 0
  %1199 = vmatprep.subr.bf16.mxu0 0
  %1200 = vmatpush1.bf16.msra.mxu0 0
  %1201 = vmatprep.subr.bf16.mxu0 0
  %1202 = vmatpush1.bf16.msra.mxu0 0
  %1203 = vmatprep.subr.bf16.mxu0 0
  %1204 = vmatpush1.bf16.msra.mxu0 0
  %1205 = vmatprep.subr.bf16.mxu0 0
  %1206 = vmatpush1.bf16.msra.mxu0 0
  %1207 = vmatprep.subr.bf16.mxu0 0
  %1208 = vmatpush1.bf16.msra.mxu0 0
  %1209 = vmatprep.subr.bf16.mxu0 0
  %1210 = vmatpush1.bf16.msra.mxu0 0
  %1211 = vmatprep.subr.bf16.mxu0 0
  %1212 = vmatpush1.bf16.msra.mxu0 0
  %1213 = vmatprep.subr.bf16.mxu0 0
  %1214 = vmatpush1.bf16.msra.mxu0 0
  %1215 = vmatprep.subr.bf16.mxu0 0
  %1216 = vmatpush1.bf16.msra.mxu0 0
  %1217 = vmatprep.subr.bf16.mxu0 0
  %1218 = vmatpush1.bf16.msra.mxu0 0
  %1219 = vmatprep.subr.bf16.mxu0 0
  %1220 = vmatpush1.bf16.msra.mxu0 0
  %1221 = vmatprep.subr.bf16.mxu0 0
  %1222 = vmatpush1.bf16.msra.mxu0 0
  %1223 = vmatprep.mubr.bf16.mxu0 0
  %1224 = vmatmul.mubr.bf16.gmra.mrb[0].mxu0 %v1189
  %v1225 = vpop.f32.mrb[0].mxu0
  %v1226 = vadd.f32 0.0, %v1225
  %v1227 = vpop.f32.mrb[0].mxu0
  %v1228 = vpop.f32.mrb[0].mxu0
  %v1229 = vpop.f32.mrb[0].mxu0
  %1230 = vdwg.mxu0
  %v1231 = vadd.f32 %v1183, %v1226
  %v1232 = vxor.u32 %v1231, 2147483648
  %v1233 = vmul.f32 %v1232, 1.442695
  %v1234 = vpow.pop %v1233
  %v1235 = vadd.f32 %v1234, 1.0
  %v1236 = vrcp.pop %v1235
  %v1237 = vmul.f32 1.0, %v1236
  %v1238 = vtanh.pop %v1231
  %v1239 = vmul.f32 %v1237, %v1176
  %1241 = vrot.lane.b32.xlu0 %v1238, 64
  %v1242 = vpop.permute.xlu0 %1241
  %v1244 = vmul.f32 %v1237, %v1242
  %1246 = vrot.lane.b32.xlu0 %v1244, 32
  %v1247 = vpop.permute.xlu0 %1246
  %v1249 = vadd.f32 %v1239, %v1247
  %v1250 = vtanh.pop %v1249
  %1252 = vrot.lane.b32.xlu0 %v1250, 64
  %v1253 = vpop.permute.xlu0 %1252
  %v1255 = vmul.f32 %v1237, %v1253
  %v1256 = vld [vmem:[%s428] sm:$0xff]
  %v1257 = vpack.c.bf16 %v1255, %v1255
  %1259 = vrot.lane.b32.xlu0 %v1257, 32
  %v1260 = vpop.permute.xlu0 %1259
  %v1262 = vsel %vm162, %v1260, 0
  %1264 = vmatprep.subr.bf16.mxu0 0
  %1265 = vmatpush1.bf16.msra.mxu0 %v1041
  %1266 = vmatprep.subr.bf16.mxu0 0
  %1267 = vmatpush1.bf16.msra.mxu0 %v1042
  %1268 = vmatprep.subr.bf16.mxu0 0
  %1269 = vmatpush1.bf16.msra.mxu0 0
  %1270 = vmatprep.subr.bf16.mxu0 0
  %1271 = vmatpush1.bf16.msra.mxu0 0
  %1272 = vmatprep.subr.bf16.mxu0 0
  %1273 = vmatpush1.bf16.msra.mxu0 0
  %1274 = vmatprep.subr.bf16.mxu0 0
  %1275 = vmatpush1.bf16.msra.mxu0 0
  %1276 = vmatprep.subr.bf16.mxu0 0
  %1277 = vmatpush1.bf16.msra.mxu0 0
  %1278 = vmatprep.subr.bf16.mxu0 0
  %1279 = vmatpush1.bf16.msra.mxu0 0
  %1280 = vmatprep.subr.bf16.mxu0 0
  %1281 = vmatpush1.bf16.msra.mxu0 0
  %1282 = vmatprep.subr.bf16.mxu0 0
  %1283 = vmatpush1.bf16.msra.mxu0 0
  %1284 = vmatprep.subr.bf16.mxu0 0
  %1285 = vmatpush1.bf16.msra.mxu0 0
  %1286 = vmatprep.subr.bf16.mxu0 0
  %1287 = vmatpush1.bf16.msra.mxu0 0
  %1288 = vmatprep.subr.bf16.mxu0 0
  %1289 = vmatpush1.bf16.msra.mxu0 0
  %1290 = vmatprep.subr.bf16.mxu0 0
  %1291 = vmatpush1.bf16.msra.mxu0 0
  %1292 = vmatprep.subr.bf16.mxu0 0
  %1293 = vmatpush1.bf16.msra.mxu0 0
  %1294 = vmatprep.subr.bf16.mxu0 0
  %1295 = vmatpush1.bf16.msra.mxu0 0
  %1296 = vmatprep.mubr.bf16.mxu0 0
  %1297 = vmatmul.mubr.bf16.gmra.mrb[0].mxu0 %v1262
  %v1298 = vpop.f32.mrb[0].mxu0
  %v1299 = vadd.f32 0.0, %v1298
  %v1300 = vpop.f32.mrb[0].mxu0
  %v1301 = vpop.f32.mrb[0].mxu0
  %v1302 = vpop.f32.mrb[0].mxu0
  %1303 = vdwg.mxu0
  %v1304 = vadd.f32 %v1256, %v1299
  %v1305 = vxor.u32 %v1304, 2147483648
  %v1306 = vmul.f32 %v1305, 1.442695
  %v1307 = vpow.pop %v1306
  %v1308 = vadd.f32 %v1307, 1.0
  %v1309 = vrcp.pop %v1308
  %v1310 = vmul.f32 1.0, %v1309
  %v1311 = vtanh.pop %v1304
  %v1312 = vmul.f32 %v1310, %v1249
  %1314 = vrot.lane.b32.xlu0 %v1311, 64
  %v1315 = vpop.permute.xlu0 %1314
  %v1317 = vmul.f32 %v1310, %v1315
  %1319 = vrot.lane.b32.xlu0 %v1317, 32
  %v1320 = vpop.permute.xlu0 %1319
  %v1322 = vadd.f32 %v1312, %v1320
  %v1323 = vtanh.pop %v1322
  %1325 = vrot.lane.b32.xlu0 %v1323, 64
  %v1326 = vpop.permute.xlu0 %1325
  %v1328 = vmul.f32 %v1310, %v1326
  %v1329 = vld [vmem:[%s524] sm:$0xff]
  %v1330 = vpack.c.bf16 %v1328, %v1328
  %1332 = vrot.lane.b32.xlu0 %v1330, 32
  %v1333 = vpop.permute.xlu0 %1332
  %v1335 = vsel %vm162, %v1333, 0
  %1337 = vmatprep.subr.bf16.mxu0 0
  %1338 = vmatpush1.bf16.msra.mxu0 %v1041
  %1339 = vmatprep.subr.bf16.mxu0 0
  %1340 = vmatpush1.bf16.msra.mxu0 %v1042
  %1341 = vmatprep.subr.bf16.mxu0 0
  %1342 = vmatpush1.bf16.msra.mxu0 0
  %1343 = vmatprep.subr.bf16.mxu0 0
  %1344 = vmatpush1.bf16.msra.mxu0 0
  %1345 = vmatprep.subr.bf16.mxu0 0
  %1346 = vmatpush1.bf16.msra.mxu0 0
  %1347 = vmatprep.subr.bf16.mxu0 0
  %1348 = vmatpush1.bf16.msra.mxu0 0
  %1349 = vmatprep.subr.bf16.mxu0 0
  %1350 = vmatpush1.bf16.msra.mxu0 0
  %1351 = vmatprep.subr.bf16.mxu0 0
  %1352 = vmatpush1.bf16.msra.mxu0 0
  %1353 = vmatprep.subr.bf16.mxu0 0
  %1354 = vmatpush1.bf16.msra.mxu0 0
  %1355 = vmatprep.subr.bf16.mxu0 0
  %1356 = vmatpush1.bf16.msra.mxu0 0
  %1357 = vmatprep.subr.bf16.mxu0 0
  %1358 = vmatpush1.bf16.msra.mxu0 0
  %1359 = vmatprep.subr.bf16.mxu0 0
  %1360 = vmatpush1.bf16.msra.mxu0 0
  %1361 = vmatprep.subr.bf16.mxu0 0
  %1362 = vmatpush1.bf16.msra.mxu0 0
  %1363 = vmatprep.subr.bf16.mxu0 0
  %1364 = vmatpush1.bf16.msra.mxu0 0
  %1365 = vmatprep.subr.bf16.mxu0 0
  %1366 = vmatpush1.bf16.msra.mxu0 0
  %1367 = vmatprep.subr.bf16.mxu0 0
  %1368 = vmatpush1.bf16.msra.mxu0 0
  %1369 = vmatprep.mubr.bf16.mxu0 0
  %1370 = vmatmul.mubr.bf16.gmra.mrb[0].mxu0 %v1335
  %v1371 = vpop.f32.mrb[0].mxu0
  %v1372 = vadd.f32 0.0, %v1371
  %v1373 = vpop.f32.mrb[0].mxu0
  %v1374 = vpop.f32.mrb[0].mxu0
  %v1375 = vpop.f32.mrb[0].mxu0
  %1376 = vdwg.mxu0
  %v1377 = vadd.f32 %v1329, %v1372
  %v1378 = vxor.u32 %v1377, 2147483648
  %v1379 = vmul.f32 %v1378, 1.442695
  %v1380 = vpow.pop %v1379
  %v1381 = vadd.f32 %v1380, 1.0
  %v1382 = vrcp.pop %v1381
  %v1383 = vmul.f32 1.0, %v1382
  %v1384 = vtanh.pop %v1377
  %v1385 = vmul.f32 %v1383, %v1322
  %1387 = vrot.lane.b32.xlu0 %v1384, 64
  %v1388 = vpop.permute.xlu0 %1387
  %v1390 = vmul.f32 %v1383, %v1388
  %1392 = vrot.lane.b32.xlu0 %v1390, 32
  %v1393 = vpop.permute.xlu0 %1392
  %v1395 = vadd.f32 %v1385, %v1393
  %v1396 = vtanh.pop %v1395
  %1398 = vrot.lane.b32.xlu0 %v1396, 64
  %v1399 = vpop.permute.xlu0 %1398
  %v1401 = vmul.f32 %v1383, %v1399
  %v1402 = vld [vmem:[%s620] sm:$0xff]
  %v1403 = vpack.c.bf16 %v1401, %v1401
  %1405 = vrot.lane.b32.xlu0 %v1403, 32
  %v1406 = vpop.permute.xlu0 %1405
  %v1408 = vsel %vm162, %v1406, 0
  %1410 = vmatprep.subr.bf16.mxu0 0
  %1411 = vmatpush1.bf16.msra.mxu0 %v1041
  %1412 = vmatprep.subr.bf16.mxu0 0
  %1413 = vmatpush1.bf16.msra.mxu0 %v1042
  %1414 = vmatprep.subr.bf16.mxu0 0
  %1415 = vmatpush1.bf16.msra.mxu0 0
  %1416 = vmatprep.subr.bf16.mxu0 0
  %1417 = vmatpush1.bf16.msra.mxu0 0
  %1418 = vmatprep.subr.bf16.mxu0 0
  %1419 = vmatpush1.bf16.msra.mxu0 0
  %1420 = vmatprep.subr.bf16.mxu0 0
  %1421 = vmatpush1.bf16.msra.mxu0 0
  %1422 = vmatprep.subr.bf16.mxu0 0
  %1423 = vmatpush1.bf16.msra.mxu0 0
  %1424 = vmatprep.subr.bf16.mxu0 0
  %1425 = vmatpush1.bf16.msra.mxu0 0
  %1426 = vmatprep.subr.bf16.mxu0 0
  %1427 = vmatpush1.bf16.msra.mxu0 0
  %1428 = vmatprep.subr.bf16.mxu0 0
  %1429 = vmatpush1.bf16.msra.mxu0 0
  %1430 = vmatprep.subr.bf16.mxu0 0
  %1431 = vmatpush1.bf16.msra.mxu0 0
  %1432 = vmatprep.subr.bf16.mxu0 0
  %1433 = vmatpush1.bf16.msra.mxu0 0
  %1434 = vmatprep.subr.bf16.mxu0 0
  %1435 = vmatpush1.bf16.msra.mxu0 0
  %1436 = vmatprep.subr.bf16.mxu0 0
  %1437 = vmatpush1.bf16.msra.mxu0 0
  %1438 = vmatprep.subr.bf16.mxu0 0
  %1439 = vmatpush1.bf16.msra.mxu0 0
  %1440 = vmatprep.subr.bf16.mxu0 0
  %1441 = vmatpush1.bf16.msra.mxu0 0
  %1442 = vmatprep.mubr.bf16.mxu0 0
  %1443 = vmatmul.mubr.bf16.gmra.mrb[0].mxu0 %v1408
  %v1444 = vpop.f32.mrb[0].mxu0
  %v1445 = vadd.f32 0.0, %v1444
  %v1446 = vpop.f32.mrb[0].mxu0
  %v1447 = vpop.f32.mrb[0].mxu0
  %v1448 = vpop.f32.mrb[0].mxu0
  %1449 = vdwg.mxu0
  %v1450 = vadd.f32 %v1402, %v1445
  %v1451 = vxor.u32 %v1450, 2147483648
  %v1452 = vmul.f32 %v1451, 1.442695
  %v1453 = vpow.pop %v1452
  %v1454 = vadd.f32 %v1453, 1.0
  %v1455 = vrcp.pop %v1454
  %v1456 = vmul.f32 1.0, %v1455
  %v1457 = vtanh.pop %v1450
  %v1458 = vmul.f32 %v1456, %v1395
  %1460 = vrot.lane.b32.xlu0 %v1457, 64
  %v1461 = vpop.permute.xlu0 %1460
  %v1463 = vmul.f32 %v1456, %v1461
  %1465 = vrot.lane.b32.xlu0 %v1463, 32
  %v1466 = vpop.permute.xlu0 %1465
  %v1468 = vadd.f32 %v1458, %v1466
  %v1469 = vtanh.pop %v1468
  %1471 = vrot.lane.b32.xlu0 %v1469, 64
  %v1472 = vpop.permute.xlu0 %1471
  %v1474 = vmul.f32 %v1456, %v1472
  %v1475 = vld [vmem:[%s716] sm:$0xff]
  %v1476 = vpack.c.bf16 %v1474, %v1474
  %1478 = vrot.lane.b32.xlu0 %v1476, 32
  %v1479 = vpop.permute.xlu0 %1478
  %v1481 = vsel %vm162, %v1479, 0
  %1483 = vmatprep.subr.bf16.mxu0 0
  %1484 = vmatpush1.bf16.msra.mxu0 %v1041
  %1485 = vmatprep.subr.bf16.mxu0 0
  %1486 = vmatpush1.bf16.msra.mxu0 %v1042
  %1487 = vmatprep.subr.bf16.mxu0 0
  %1488 = vmatpush1.bf16.msra.mxu0 0
  %1489 = vmatprep.subr.bf16.mxu0 0
  %1490 = vmatpush1.bf16.msra.mxu0 0
  %1491 = vmatprep.subr.bf16.mxu0 0
  %1492 = vmatpush1.bf16.msra.mxu0 0
  %1493 = vmatprep.subr.bf16.mxu0 0
  %1494 = vmatpush1.bf16.msra.mxu0 0
  %1495 = vmatprep.subr.bf16.mxu0 0
  %1496 = vmatpush1.bf16.msra.mxu0 0
  %1497 = vmatprep.subr.bf16.mxu0 0
  %1498 = vmatpush1.bf16.msra.mxu0 0
  %1499 = vmatprep.subr.bf16.mxu0 0
  %1500 = vmatpush1.bf16.msra.mxu0 0
  %1501 = vmatprep.subr.bf16.mxu0 0
  %1502 = vmatpush1.bf16.msra.mxu0 0
  %1503 = vmatprep.subr.bf16.mxu0 0
  %1504 = vmatpush1.bf16.msra.mxu0 0
  %1505 = vmatprep.subr.bf16.mxu0 0
  %1506 = vmatpush1.bf16.msra.mxu0 0
  %1507 = vmatprep.subr.bf16.mxu0 0
  %1508 = vmatpush1.bf16.msra.mxu0 0
  %1509 = vmatprep.subr.bf16.mxu0 0
  %1510 = vmatpush1.bf16.msra.mxu0 0
  %1511 = vmatprep.subr.bf16.mxu0 0
  %1512 = vmatpush1.bf16.msra.mxu0 0
  %1513 = vmatprep.subr.bf16.mxu0 0
  %1514 = vmatpush1.bf16.msra.mxu0 0
  %1515 = vmatprep.mubr.bf16.mxu0 0
  %1516 = vmatmul.mubr.bf16.gmra.mrb[0].mxu0 %v1481
  %v1517 = vpop.f32.mrb[0].mxu0
  %v1518 = vadd.f32 0.0, %v1517
  %v1519 = vpop.f32.mrb[0].mxu0
  %v1520 = vpop.f32.mrb[0].mxu0
  %v1521 = vpop.f32.mrb[0].mxu0
  %1522 = vdwg.mxu0
  %v1523 = vadd.f32 %v1475, %v1518
  %v1524 = vxor.u32 %v1523, 2147483648
  %v1525 = vmul.f32 %v1524, 1.442695
  %v1526 = vpow.pop %v1525
  %v1527 = vadd.f32 %v1526, 1.0
  %v1528 = vrcp.pop %v1527
  %v1529 = vmul.f32 1.0, %v1528
  %v1530 = vtanh.pop %v1523
  %v1531 = vmul.f32 %v1529, %v1468
  %1533 = vrot.lane.b32.xlu0 %v1530, 64
  %v1534 = vpop.permute.xlu0 %1533
  %v1536 = vmul.f32 %v1529, %v1534
  %1538 = vrot.lane.b32.xlu0 %v1536, 32
  %v1539 = vpop.permute.xlu0 %1538
  %v1541 = vadd.f32 %v1531, %v1539
  %v1542 = vtanh.pop %v1541
  %1544 = vrot.lane.b32.xlu0 %v1542, 64
  %v1545 = vpop.permute.xlu0 %1544
  %v1547 = vmul.f32 %v1529, %v1545
  %v1548 = vld [vmem:[%s812] sm:$0xff]
  %v1549 = vpack.c.bf16 %v1547, %v1547
  %1551 = vrot.lane.b32.xlu0 %v1549, 32
  %v1552 = vpop.permute.xlu0 %1551
  %v1554 = vsel %vm162, %v1552, 0
  %1556 = vmatprep.subr.bf16.mxu0 0
  %1557 = vmatpush1.bf16.msra.mxu0 %v1041
  %1558 = vmatprep.subr.bf16.mxu0 0
  %1559 = vmatpush1.bf16.msra.mxu0 %v1042
  %1560 = vmatprep.subr.bf16.mxu0 0
  %1561 = vmatpush1.bf16.msra.mxu0 0
  %1562 = vmatprep.subr.bf16.mxu0 0
  %1563 = vmatpush1.bf16.msra.mxu0 0
  %1564 = vmatprep.subr.bf16.mxu0 0
  %1565 = vmatpush1.bf16.msra.mxu0 0
  %1566 = vmatprep.subr.bf16.mxu0 0
  %1567 = vmatpush1.bf16.msra.mxu0 0
  %1568 = vmatprep.subr.bf16.mxu0 0
  %1569 = vmatpush1.bf16.msra.mxu0 0
  %1570 = vmatprep.subr.bf16.mxu0 0
  %1571 = vmatpush1.bf16.msra.mxu0 0
  %1572 = vmatprep.subr.bf16.mxu0 0
  %1573 = vmatpush1.bf16.msra.mxu0 0
  %1574 = vmatprep.subr.bf16.mxu0 0
  %1575 = vmatpush1.bf16.msra.mxu0 0
  %1576 = vmatprep.subr.bf16.mxu0 0
  %1577 = vmatpush1.bf16.msra.mxu0 0
  %1578 = vmatprep.subr.bf16.mxu0 0
  %1579 = vmatpush1.bf16.msra.mxu0 0
  %1580 = vmatprep.subr.bf16.mxu0 0
  %1581 = vmatpush1.bf16.msra.mxu0 0
  %1582 = vmatprep.subr.bf16.mxu0 0
  %1583 = vmatpush1.bf16.msra.mxu0 0
  %1584 = vmatprep.subr.bf16.mxu0 0
  %1585 = vmatpush1.bf16.msra.mxu0 0
  %1586 = vmatprep.subr.bf16.mxu0 0
  %1587 = vmatpush1.bf16.msra.mxu0 0
  %1588 = vmatprep.mubr.bf16.mxu0 0
  %1589 = vmatmul.mubr.bf16.gmra.mrb[0].mxu0 %v1554
  %v1590 = vpop.f32.mrb[0].mxu0
  %v1591 = vadd.f32 0.0, %v1590
  %v1592 = vpop.f32.mrb[0].mxu0
  %v1593 = vpop.f32.mrb[0].mxu0
  %v1594 = vpop.f32.mrb[0].mxu0
  %1595 = vdwg.mxu0
  %v1596 = vadd.f32 %v1548, %v1591
  %v1597 = vxor.u32 %v1596, 2147483648
  %v1598 = vmul.f32 %v1597, 1.442695
  %v1599 = vpow.pop %v1598
  %v1600 = vadd.f32 %v1599, 1.0
  %v1601 = vrcp.pop %v1600
  %v1602 = vmul.f32 1.0, %v1601
  %v1603 = vtanh.pop %v1596
  %v1604 = vmul.f32 %v1602, %v1541
  %1606 = vrot.lane.b32.xlu0 %v1603, 64
  %v1607 = vpop.permute.xlu0 %1606
  %v1609 = vmul.f32 %v1602, %v1607
  %1611 = vrot.lane.b32.xlu0 %v1609, 32
  %v1612 = vpop.permute.xlu0 %1611
  %v1614 = vadd.f32 %v1604, %v1612
  %v1615 = vtanh.pop %v1614
  %1617 = vrot.lane.b32.xlu0 %v1615, 64
  %v1618 = vpop.permute.xlu0 %1617
  %v1620 = vmul.f32 %v1602, %v1618
  %v1621 = vpack.c.bf16 %v1620, %v901
  %v1622 = vld [vmem:[%s7] sm:$0xf]
  %v1623 = vld [vmem:[%s7 + $0x4] sm:$0xf]
  %v1624 = vld [vmem:[%s7 + $0x8] sm:$0xf]
  %v1625 = vld [vmem:[%s7 + $0xc] sm:$0xf]
  %v1626 = vld [vmem:[#allocation4] sm:$0x1]
  %v1628 = vlaneseq
  %v1629 = vshrl.u32 %v1628, 7
  %v1630 = vsub.s32 0, %v1629
  %v1631 = vrot.slane %v1626, %v1630
  %1634 = vrot.lane.b32.xlu0 %v1621, 32
  %v1635 = vpop.permute.xlu0 %1634
  %v1640 = vunpack.c.l.b16 %v1622
  %v1641 = vunpack.c.l.b16 %v1623
  %v1642 = vunpack.c.l.b16 %v1624
  %v1643 = vunpack.c.l.b16 %v1625
  %v1644 = vpack.c.b16 %v1641, %v1640
  %v1645 = vpack.c.b16 %v1643, %v1642
  %v1649 = vsel %vm162, %v1635, 0
  %1651 = vmatprep.subr.bf16.mxu0 0
  %1652 = vmatpush1.bf16.msra.mxu0 %v1644
  %1653 = vmatprep.subr.bf16.mxu0 0
  %1654 = vmatpush1.bf16.msra.mxu0 %v1645
  %1655 = vmatprep.subr.bf16.mxu0 0
  %1656 = vmatpush1.bf16.msra.mxu0 0
  %1657 = vmatprep.subr.bf16.mxu0 0
  %1658 = vmatpush1.bf16.msra.mxu0 0
  %1659 = vmatprep.subr.bf16.mxu0 0
  %1660 = vmatpush1.bf16.msra.mxu0 0
  %1661 = vmatprep.subr.bf16.mxu0 0
  %1662 = vmatpush1.bf16.msra.mxu0 0
  %1663 = vmatprep.subr.bf16.mxu0 0
  %1664 = vmatpush1.bf16.msra.mxu0 0
  %1665 = vmatprep.subr.bf16.mxu0 0
  %1666 = vmatpush1.bf16.msra.mxu0 0
  %1667 = vmatprep.subr.bf16.mxu0 0
  %1668 = vmatpush1.bf16.msra.mxu0 0
  %1669 = vmatprep.subr.bf16.mxu0 0
  %1670 = vmatpush1.bf16.msra.mxu0 0
  %1671 = vmatprep.subr.bf16.mxu0 0
  %1672 = vmatpush1.bf16.msra.mxu0 0
  %1673 = vmatprep.subr.bf16.mxu0 0
  %1674 = vmatpush1.bf16.msra.mxu0 0
  %1675 = vmatprep.subr.bf16.mxu0 0
  %1676 = vmatpush1.bf16.msra.mxu0 0
  %1677 = vmatprep.subr.bf16.mxu0 0
  %1678 = vmatpush1.bf16.msra.mxu0 0
  %1679 = vmatprep.subr.bf16.mxu0 0
  %1680 = vmatpush1.bf16.msra.mxu0 0
  %1681 = vmatprep.subr.bf16.mxu0 0
  %1682 = vmatpush1.bf16.msra.mxu0 0
  %1683 = vmatprep.mubr.bf16.mxu0 0
  %1684 = vmatmul.mubr.bf16.gmra.mrb[0].mxu0 %v1649
  %v1685 = vpop.f32.mrb[0].mxu0
  %v1686 = vadd.f32 %v1631, %v1685
  %v1687 = vpop.f32.mrb[0].mxu0
  %v1688 = vpop.f32.mrb[0].mxu0
  %v1689 = vadd.f32 %v1631, %v1688
  %v1690 = vpop.f32.mrb[0].mxu0
  %1691 = vdwg.mxu0
  %vm1692 = vcmask 7168
  %1693 = vst.msk [vmem:[%s9] sm:$0xff] %vm1692, %v1686
  %1694 = vst.msk [vmem:[%s9 + $0x8] sm:$0xff] %vm1692, %v1689
  // Predicated region
  $region38: #{lstm_predictor_forward.1} parent=0 // pred_check
    _
  $region39: #{lstm_predictor_forward.1} parent=0 // pred_check_branch
    %1696 = sbr.rel (0) target = $region41
  $region40: #{lstm_predictor_forward.1} parent=0 // pred_region
    _
  $region41: #{lstm_predictor_forward.1} parent=0 // pred_fallthru
    _
  // Predicated region
  $region42: #{lstm_predictor_forward.1} parent=0 // pred_check
    _
  $region43: #{lstm_predictor_forward.1} parent=0 // pred_check_branch
    %1698 = sbr.rel (0) target = $region45
  $region44: #{lstm_predictor_forward.1} parent=0 // pred_region
    _
  $region45: #{lstm_predictor_forward.1} parent=0 // pred_fallthru
    _

</llo_original>
